<compile_context>
chip_gen: v6e
topology: v6e:2x2x1
jax: 0.10.0
libtpu: 0.0.40
codegen_flags: <defaults>
</compile_context>

<pallas_src>
import jax
import jax.numpy as jnp
from jax.experimental import pallas as pl
from jax.experimental.pallas import tpu as pltpu


def _mlp_kernel(x_ref,
                w1_ref, b1_ref,
                w2_ref, b2_ref,
                w3_ref, b3_ref,
                w4_ref, b4_ref,
                o_ref):
    """Per-point 4-layer MLP: bf16 matmuls (f32 acc) + folded bias + ReLU."""
    h = jnp.dot(x_ref[...], w1_ref[...], preferred_element_type=jnp.float32)
    h = jnp.maximum(h + b1_ref[...], 0.0).astype(jnp.bfloat16)

    h = jnp.dot(h, w2_ref[...], preferred_element_type=jnp.float32)
    h = jnp.maximum(h + b2_ref[...], 0.0).astype(jnp.bfloat16)

    h = jnp.dot(h, w3_ref[...], preferred_element_type=jnp.float32)
    h = jnp.maximum(h + b3_ref[...], 0.0).astype(jnp.bfloat16)

    h = jnp.dot(h, w4_ref[...], preferred_element_type=jnp.float32)
    o_ref[...] = (h + b4_ref[...]).astype(o_ref.dtype)


def _full_spec(shape):
    # Whole (small) parameter array resident in VMEM for every grid step.
    return pl.BlockSpec(shape, lambda i: (0,) * len(shape))


def re_residual_net_forward(concat_feature, params, output_dim, *, tile_m=512):
    """concat_feature: (B, N, input_dim).  Returns (B, N, output_dim) float32."""
    B, N, C_in = concat_feature.shape
    x2d = concat_feature.reshape(B * N, C_in).astype(jnp.bfloat16)
    M = x2d.shape[0]

    # Ragged-M handling: zero-pad rows to a multiple of tile_m, slice back after.
    n_tiles = pl.cdiv(M, tile_m)
    M_pad = n_tiles * tile_m
    if M_pad != M:
        x2d = jnp.pad(x2d, ((0, M_pad - M), (0, 0)))

    (w1, b1), (w2, b2), (w3, b3), (w4, b4) = params
    C_out_pad = w4.shape[1]  # lane-padded (128) output width

    kernel = pl.pallas_call(
        _mlp_kernel,
        out_shape=jax.ShapeDtypeStruct((M_pad, C_out_pad), jnp.float32),
        grid_spec=pltpu.PrefetchScalarGridSpec(
            num_scalar_prefetch=0,
            grid=(n_tiles,),
            in_specs=[
                pl.BlockSpec((tile_m, C_in), lambda i: (i, 0)),
                _full_spec(w1.shape), _full_spec(b1.shape),
                _full_spec(w2.shape), _full_spec(b2.shape),
                _full_spec(w3.shape), _full_spec(b3.shape),
                _full_spec(w4.shape), _full_spec(b4.shape),
            ],
            out_specs=pl.BlockSpec((tile_m, C_out_pad), lambda i: (i, 0)),
        ),
        compiler_params=pltpu.CompilerParams(
            dimension_semantics=("parallel",)),
    )
    out2d = kernel(x2d, w1, b1, w2, b2, w3, b3, w4, b4)
    return out2d[:M, :output_dim].reshape(B, N, output_dim)


def make_params(key, dims, eps=1e-5, pad_last_to=128):
    """Folded, bf16 parameters for the [input_dim, 256, 256, 32, out] MLP.

    Eval-mode BatchNorm and the conv bias are folded into each layer:
        scale = gamma / sqrt(var + eps)
        W'    = W * scale          (per output column)
        shift = scale * (bias - mean) + beta
    so the layer is   y = x @ W' + shift.
    Last layer has no BN (W' = W, shift = bias) and is zero-padded to
    `pad_last_to` output columns for lane-dense stores.

    Returns per-layer (W: bf16 (C_in, C_out), shift: f32 (1, C_out)).
    """
    params = []
    n_layers = len(dims) - 1
    for li in range(n_layers):
        c_in, c_out = dims[li], dims[li + 1]
        key, kw, kb, kg, kbe, km, kv = jax.random.split(key, 7)
        # Conv1d(k=1) weight (out, in, 1) -> stored transposed as (in, out).
        w = jax.random.normal(kw, (c_in, c_out), jnp.float32) * 0.05
        b = jax.random.normal(kb, (c_out,), jnp.float32) * 0.05
        if li < n_layers - 1:
            gamma = 1.0 + 0.1 * jax.random.normal(kg, (c_out,), jnp.float32)
            beta = 0.1 * jax.random.normal(kbe, (c_out,), jnp.float32)
            mean = 0.1 * jax.random.normal(km, (c_out,), jnp.float32)
            var = 0.5 + jax.random.uniform(kv, (c_out,), jnp.float32)
            scale = gamma / jnp.sqrt(var + eps)
            w_f = w * scale[None, :]
            shift = scale * (b - mean) + beta
        else:
            w_f = w
            shift = b
            if pad_last_to is not None and c_out < pad_last_to:
                w_f = jnp.pad(w_f, ((0, 0), (0, pad_last_to - c_out)))
                shift = jnp.pad(shift, ((0, pad_last_to - c_out),))
                c_out = pad_last_to
        params.append((w_f.astype(jnp.bfloat16),
                       shift.reshape(1, c_out).astype(jnp.float32)))
    return params


def reference_forward(concat_feature, params, output_dim):
    """Plain-JAX reference of the same folded bf16 math (sanity check)."""
    B, N, C_in = concat_feature.shape
    h = concat_feature.reshape(B * N, C_in).astype(jnp.bfloat16).astype(jnp.float32)
    n_layers = len(params)
    for li, (w, b) in enumerate(params):
        h = h @ w.astype(jnp.float32) + b
        if li < n_layers - 1:
            h = jnp.maximum(h, 0.0).astype(jnp.bfloat16).astype(jnp.float32)
    return h[:, :output_dim].reshape(B, N, output_dim)


if __name__ == "__main__":
    input_dim = 64
    output_dim = 3
    B, N = 2, 300  # B*N = 600 points -> padded to 1024 rows, grid of 2 tiles

    key = jax.random.PRNGKey(0)
    kx, kp = jax.random.split(key)
    concat_feature = jax.random.normal(kx, (B, N, input_dim), jnp.float32)
    params = make_params(kp, [input_dim, 256, 256, 32, output_dim])

    out = re_residual_net_forward(concat_feature, params, output_dim, tile_m=512)
    out = jax.block_until_ready(out)

    ref = reference_forward(concat_feature, params, output_dim)
    assert out.shape == (B, N, output_dim)
    assert jnp.allclose(out, ref, atol=1e-2, rtol=1e-2), (
        float(jnp.max(jnp.abs(out - ref))))

    print("KERNEL_OK")
</pallas_src>

<mosaic_0001>
module attributes {stable_mosaic.version = 11 : i64} {
  func.func @_mlp_kernel(%arg0: i32, %arg1: memref<512x64xbf16, #tpu.memory_space<vmem>>, %arg2: memref<64x256xbf16, #tpu.memory_space<vmem>>, %arg3: memref<1x256xf32, #tpu.memory_space<vmem>>, %arg4: memref<256x256xbf16, #tpu.memory_space<vmem>>, %arg5: memref<1x256xf32, #tpu.memory_space<vmem>>, %arg6: memref<256x32xbf16, #tpu.memory_space<vmem>>, %arg7: memref<1x32xf32, #tpu.memory_space<vmem>>, %arg8: memref<32x128xbf16, #tpu.memory_space<vmem>>, %arg9: memref<1x128xf32, #tpu.memory_space<vmem>>, %arg10: memref<512x128xf32, #tpu.memory_space<vmem>>) attributes {dimension_semantics = [#tpu.dimension_semantics<parallel>], iteration_bounds = array<i64: 2>, scalar_prefetch = 0 : i64, scratch_operands = 0 : i64, tpu.core_type = #tpu.core_type<tc>, window_params = [{transform_indices = @transform_0, window_bounds = array<i64: 512, 64>}, {pipeline_mode = #tpu.pipeline_mode<synchronous>, transform_indices = @transform_1, window_bounds = array<i64: 64, 256>}, {pipeline_mode = #tpu.pipeline_mode<synchronous>, transform_indices = @transform_2, window_bounds = array<i64: 1, 256>}, {pipeline_mode = #tpu.pipeline_mode<synchronous>, transform_indices = @transform_3, window_bounds = array<i64: 256, 256>}, {pipeline_mode = #tpu.pipeline_mode<synchronous>, transform_indices = @transform_4, window_bounds = array<i64: 1, 256>}, {pipeline_mode = #tpu.pipeline_mode<synchronous>, transform_indices = @transform_5, window_bounds = array<i64: 256, 32>}, {pipeline_mode = #tpu.pipeline_mode<synchronous>, transform_indices = @transform_6, window_bounds = array<i64: 1, 32>}, {pipeline_mode = #tpu.pipeline_mode<synchronous>, transform_indices = @transform_7, window_bounds = array<i64: 32, 128>}, {pipeline_mode = #tpu.pipeline_mode<synchronous>, transform_indices = @transform_8, window_bounds = array<i64: 1, 128>}, {transform_indices = @transform_9, window_bounds = array<i64: 512, 128>}]} {
    %c0 = arith.constant 0 : index
    %c0_0 = arith.constant 0 : index
    %0 = vector.load %arg1[%c0, %c0_0] : memref<512x64xbf16, #tpu.memory_space<vmem>>, vector<512x64xbf16>
    %c0_1 = arith.constant 0 : index
    %c0_2 = arith.constant 0 : index
    %1 = vector.load %arg2[%c0_1, %c0_2] : memref<64x256xbf16, #tpu.memory_space<vmem>>, vector<64x256xbf16>
    %cst = arith.constant dense<0.000000e+00> : vector<512x256xf32>
    %2 = tpu.matmul %0, %1, %cst {dimension_numbers = #tpu.dot_dimension_numbers<[1], [0], [0], [1], [0, 0, 1, 1], [], []>} : vector<512x64xbf16>, vector<64x256xbf16>, vector<512x256xf32> -> vector<512x256xf32>
    %c0_3 = arith.constant 0 : index
    %c0_4 = arith.constant 0 : index
    %3 = vector.load %arg3[%c0_3, %c0_4] : memref<1x256xf32, #tpu.memory_space<vmem>>, vector<1x256xf32>
    %4 = vector.broadcast %3 : vector<1x256xf32> to vector<512x256xf32>
    %5 = arith.addf %2, %4 : vector<512x256xf32>
    %cst_5 = arith.constant 0.000000e+00 : f32
    %6 = vector.broadcast %cst_5 : f32 to vector<512x256xf32>
    %7 = arith.maximumf %5, %6 : vector<512x256xf32>
    %8 = arith.truncf %7 : vector<512x256xf32> to vector<512x256xbf16>
    %c0_6 = arith.constant 0 : index
    %c0_7 = arith.constant 0 : index
    %9 = vector.load %arg4[%c0_6, %c0_7] : memref<256x256xbf16, #tpu.memory_space<vmem>>, vector<256x256xbf16>
    %cst_8 = arith.constant dense<0.000000e+00> : vector<512x256xf32>
    %10 = tpu.matmul %8, %9, %cst_8 {dimension_numbers = #tpu.dot_dimension_numbers<[1], [0], [0], [1], [0, 0, 1, 1], [], []>} : vector<512x256xbf16>, vector<256x256xbf16>, vector<512x256xf32> -> vector<512x256xf32>
    %c0_9 = arith.constant 0 : index
    %c0_10 = arith.constant 0 : index
    %11 = vector.load %arg5[%c0_9, %c0_10] : memref<1x256xf32, #tpu.memory_space<vmem>>, vector<1x256xf32>
    %12 = vector.broadcast %11 : vector<1x256xf32> to vector<512x256xf32>
    %13 = arith.addf %10, %12 : vector<512x256xf32>
    %cst_11 = arith.constant 0.000000e+00 : f32
    %14 = vector.broadcast %cst_11 : f32 to vector<512x256xf32>
    %15 = arith.maximumf %13, %14 : vector<512x256xf32>
    %16 = arith.truncf %15 : vector<512x256xf32> to vector<512x256xbf16>
    %c0_12 = arith.constant 0 : index
    %c0_13 = arith.constant 0 : index
    %17 = vector.load %arg6[%c0_12, %c0_13] : memref<256x32xbf16, #tpu.memory_space<vmem>>, vector<256x32xbf16>
    %cst_14 = arith.constant dense<0.000000e+00> : vector<512x32xf32>
    %18 = tpu.matmul %16, %17, %cst_14 {dimension_numbers = #tpu.dot_dimension_numbers<[1], [0], [0], [1], [0, 0, 1, 1], [], []>} : vector<512x256xbf16>, vector<256x32xbf16>, vector<512x32xf32> -> vector<512x32xf32>
    %c0_15 = arith.constant 0 : index
    %c0_16 = arith.constant 0 : index
    %19 = vector.load %arg7[%c0_15, %c0_16] : memref<1x32xf32, #tpu.memory_space<vmem>>, vector<1x32xf32>
    %20 = vector.broadcast %19 : vector<1x32xf32> to vector<512x32xf32>
    %21 = arith.addf %18, %20 : vector<512x32xf32>
    %cst_17 = arith.constant 0.000000e+00 : f32
    %22 = vector.broadcast %cst_17 : f32 to vector<512x32xf32>
    %23 = arith.maximumf %21, %22 : vector<512x32xf32>
    %24 = arith.truncf %23 : vector<512x32xf32> to vector<512x32xbf16>
    %c0_18 = arith.constant 0 : index
    %c0_19 = arith.constant 0 : index
    %25 = vector.load %arg8[%c0_18, %c0_19] : memref<32x128xbf16, #tpu.memory_space<vmem>>, vector<32x128xbf16>
    %cst_20 = arith.constant dense<0.000000e+00> : vector<512x128xf32>
    %26 = tpu.matmul %24, %25, %cst_20 {dimension_numbers = #tpu.dot_dimension_numbers<[1], [0], [0], [1], [0, 0, 1, 1], [], []>} : vector<512x32xbf16>, vector<32x128xbf16>, vector<512x128xf32> -> vector<512x128xf32>
    %c0_21 = arith.constant 0 : index
    %c0_22 = arith.constant 0 : index
    %27 = vector.load %arg9[%c0_21, %c0_22] : memref<1x128xf32, #tpu.memory_space<vmem>>, vector<1x128xf32>
    %28 = vector.broadcast %27 : vector<1x128xf32> to vector<512x128xf32>
    %29 = arith.addf %26, %28 : vector<512x128xf32>
    %c0_23 = arith.constant 0 : index
    %c0_24 = arith.constant 0 : index
    %30 = vector.load %arg10[%c0_23, %c0_24] : memref<512x128xf32, #tpu.memory_space<vmem>>, vector<512x128xf32>
    tpu.vector_store %arg10[%c0_23, %c0_24], %29 {strides = array<i32>} : memref<512x128xf32, #tpu.memory_space<vmem>>, vector<512x128xf32>,
    return
  }
  func.func @transform_0(%arg0: i32) -> (i32, i32) {
    %c0_i32 = arith.constant 0 : i32
    %c0_i32_0 = arith.constant 0 : i32
    return %arg0, %c0_i32 : i32, i32
  }
  func.func @transform_1(%arg0: i32) -> (i32, i32) {
    %c0_i32 = arith.constant 0 : i32
    %c0_i32_0 = arith.constant 0 : i32
    %c0_i32_1 = arith.constant 0 : i32
    return %c0_i32, %c0_i32_0 : i32, i32
  }
  func.func @transform_2(%arg0: i32) -> (i32, i32) {
    %c0_i32 = arith.constant 0 : i32
    %c0_i32_0 = arith.constant 0 : i32
    %c0_i32_1 = arith.constant 0 : i32
    return %c0_i32, %c0_i32_0 : i32, i32
  }
  func.func @transform_3(%arg0: i32) -> (i32, i32) {
    %c0_i32 = arith.constant 0 : i32
    %c0_i32_0 = arith.constant 0 : i32
    %c0_i32_1 = arith.constant 0 : i32
    return %c0_i32, %c0_i32_0 : i32, i32
  }
  func.func @transform_4(%arg0: i32) -> (i32, i32) {
    %c0_i32 = arith.constant 0 : i32
    %c0_i32_0 = arith.constant 0 : i32
    %c0_i32_1 = arith.constant 0 : i32
    return %c0_i32, %c0_i32_0 : i32, i32
  }
  func.func @transform_5(%arg0: i32) -> (i32, i32) {
    %c0_i32 = arith.constant 0 : i32
    %c0_i32_0 = arith.constant 0 : i32
    %c0_i32_1 = arith.constant 0 : i32
    return %c0_i32, %c0_i32_0 : i32, i32
  }
  func.func @transform_6(%arg0: i32) -> (i32, i32) {
    %c0_i32 = arith.constant 0 : i32
    %c0_i32_0 = arith.constant 0 : i32
    %c0_i32_1 = arith.constant 0 : i32
    return %c0_i32, %c0_i32_0 : i32, i32
  }
  func.func @transform_7(%arg0: i32) -> (i32, i32) {
    %c0_i32 = arith.constant 0 : i32
    %c0_i32_0 = arith.constant 0 : i32
    %c0_i32_1 = arith.constant 0 : i32
    return %c0_i32, %c0_i32_0 : i32, i32
  }
  func.func @transform_8(%arg0: i32) -> (i32, i32) {
    %c0_i32 = arith.constant 0 : i32
    %c0_i32_0 = arith.constant 0 : i32
    %c0_i32_1 = arith.constant 0 : i32
    return %c0_i32, %c0_i32_0 : i32, i32
  }
  func.func @transform_9(%arg0: i32) -> (i32, i32) {
    %c0_i32 = arith.constant 0 : i32
    %c0_i32_0 = arith.constant 0 : i32
    return %arg0, %c0_i32 : i32, i32
  }
}

</mosaic_0001>

<llo_original>
// kernel: tpu_custom_call.1
$region0: #{tpu_custom_call.1}
  #allocation0 [shape = 'u32[]', space=smem, size = 0x4, offset = 0x4, fixed_abs, tag = 'smem constant byte address 0x4 - core index']
  #allocation1 [shape = 'u32[144,128]{1,0:T(1,128)}', space=vmem, size = 0x12000, scoped, tag = 'internal scratch']
  %s0 = inlined_call_operand.vmem [shape: bf16[1024,64], index: 0, kind: input, shape index: {}]
  %s1 = inlined_call_operand.vmem [shape: bf16[64,256], index: 1, kind: input, shape index: {}]
  %s2 = inlined_call_operand.vmem [shape: f32[1,256], index: 2, kind: input, shape index: {}]
  %s3 = inlined_call_operand.vmem [shape: bf16[256,256], index: 3, kind: input, shape index: {}]
  %s4 = inlined_call_operand.vmem [shape: f32[1,256], index: 4, kind: input, shape index: {}]
  %s5 = inlined_call_operand.vmem [shape: bf16[256,32], index: 5, kind: input, shape index: {}]
  %s6 = inlined_call_operand.vmem [shape: f32[1,32], index: 6, kind: input, shape index: {}]
  %s7 = inlined_call_operand.vmem [shape: bf16[32,128], index: 7, kind: input, shape index: {}]
  %s8 = inlined_call_operand.vmem [shape: f32[1,128], index: 8, kind: input, shape index: {}]
  %s9 = inlined_call_operand.hbm [shape: f32[1024,128], index: 9, kind: output, shape index: {}]
  %s10 = sld [smem:[#allocation0]]
  $region69: #{tpu_custom_call.1} parent=0
    _
  %s12 = ssub.s32 1, %s10
  %s13 = scalar_select 0, %s12, %s10
  $region1: #{tpu_custom_call.1} parent=0
    #allocation2 [shape = 'u8[524288]{0}', space=vmem, size = 0x80000, scoped, tag = 'output window, operand 0']
    #allocation3 [shape = 's32[2]{0}', space=sflag, size = 0x8, scoped, tag = 'scoped memory for tpu_custom_call.1']
    %14 = vsyncpa [#allocation3], 0
    %s15 = scalar_lea.sflag [#allocation3], 1
    %16 = vsyncpa %s15, 0
    loop: start=0, step=1, limit=4
    $region2: #{tpu_custom_call.1} parent=1 // loop_pre_header
      _
    $region3: #{tpu_custom_call.1} parent=1 // loop_header
      %s18 = sphi 0, %s22
      %p19 = scmp.ge.s32.totalorder %s18, 4
      %s28 = sphi 0, %s30
      %s31 = sphi 0, %s28
      %s32 = sphi 0, %s31
      %s48 = sphi 0, %s32
      %s52 = sphi 0, %s52
      %s54 = sphi 0, %s52
      %s55 = sphi 0, %s54
      %s69 = sphi 0, %s55
      %s73 = sphi 0, %s73
      %s75 = sphi 0, %s73
      %s76 = sphi 0, %s75
      %s90 = sphi 0, %s76
      %s94 = sphi 0, %s94
      %s96 = sphi 0, %s94
      %s97 = sphi 0, %s96
      %s111 = sphi 0, %s97
      %s115 = sphi 0, %s115
      %s117 = sphi 0, %s115
      %s118 = sphi 0, %s117
      %s132 = sphi 0, %s118
      %s136 = sphi 0, %s136
      %s138 = sphi 0, %s136
      %s139 = sphi 0, %s138
      %s153 = sphi 0, %s139
      %s157 = sphi 0, %s157
      %s159 = sphi 0, %s157
      %s160 = sphi 0, %s159
      %s174 = sphi 0, %s160
      %s178 = sphi 0, %s178
      %s180 = sphi 0, %s178
      %s181 = sphi 0, %s180
      %s195 = sphi 0, %s181
      %s199 = sphi 0, %s199
      %s201 = sphi 0, %s199
      %s202 = sphi 0, %s201
      %s216 = sphi 0, %s202
      %s222 = sphi 0, %s224
      %s225 = sphi 0, %s222
      %s226 = sphi 0, %s225
      %s242 = sphi 0, %s226
    $region4: #{tpu_custom_call.1} parent=1 // loop_header_branch
      %21 = sbr.rel (%p19) target = $region8
    $region5: #{tpu_custom_call.1} parent=1 // loop_body
      %s23 = ssub.s32 %s18, 1
      %s24 = ssub.s32 %s18, 2
      %s25 = sadd.s32 %s18, 1
      %s26 = ssub.s32 %s18, %s25
      %p27 = scmp.eq.s32.totalorder %s26, 0
      %s29 = sadd.s32 %s28, 1
      %s30 = scalar_select %p27, %s28, %s29
      %p33 = pneg %p27
      %p34 = scmp.eq.s32.totalorder %s18, 1
      %p35 = por %p33, %p34
      %p36 = scmp.ne.s32.totalorder %s28, %s31
      %p37 = scmp.eq.s32.totalorder %s18, 0
      %p38 = por %p36, %p37
      %p39 = scmp.ne.s32.totalorder %s28, %s31
      %p40 = scmp.eq.s32.totalorder %s23, 1
      %p41 = por %p39, %p40
      %p42 = scmp.ne.s32.totalorder %s31, %s32
      %p43 = scmp.eq.s32.totalorder %s23, 0
      %p44 = por %p42, %p43
      %p45 = scmp.ne.s32.totalorder %s31, %s32
      %p46 = scmp.eq.s32.totalorder %s24, 1
      %p47 = por %p45, %p46
      %p49 = scmp.ne.s32.totalorder %s32, %s48
      %p50 = scmp.eq.s32.totalorder %s24, 0
      %p51 = por %p49, %p50
      %s53 = sadd.s32 %s52, 1
      %p56 = scmp.eq.s32.totalorder %s18, 1
      %p57 = scmp.ne.s32.totalorder %s52, %s54
      %p58 = scmp.eq.s32.totalorder %s18, 0
      %p59 = por %p57, %p58
      %p60 = scmp.ne.s32.totalorder %s52, %s54
      %p61 = scmp.eq.s32.totalorder %s23, 1
      %p62 = por %p60, %p61
      %p63 = scmp.ne.s32.totalorder %s54, %s55
      %p64 = scmp.eq.s32.totalorder %s23, 0
      %p65 = por %p63, %p64
      %p66 = scmp.ne.s32.totalorder %s54, %s55
      %p67 = scmp.eq.s32.totalorder %s24, 1
      %p68 = por %p66, %p67
      %p70 = scmp.ne.s32.totalorder %s55, %s69
      %p71 = scmp.eq.s32.totalorder %s24, 0
      %p72 = por %p70, %p71
      %s74 = sadd.s32 %s73, 1
      %p77 = scmp.eq.s32.totalorder %s18, 1
      %p78 = scmp.ne.s32.totalorder %s73, %s75
      %p79 = scmp.eq.s32.totalorder %s18, 0
      %p80 = por %p78, %p79
      %p81 = scmp.ne.s32.totalorder %s73, %s75
      %p82 = scmp.eq.s32.totalorder %s23, 1
      %p83 = por %p81, %p82
      %p84 = scmp.ne.s32.totalorder %s75, %s76
      %p85 = scmp.eq.s32.totalorder %s23, 0
      %p86 = por %p84, %p85
      %p87 = scmp.ne.s32.totalorder %s75, %s76
      %p88 = scmp.eq.s32.totalorder %s24, 1
      %p89 = por %p87, %p88
      %p91 = scmp.ne.s32.totalorder %s76, %s90
      %p92 = scmp.eq.s32.totalorder %s24, 0
      %p93 = por %p91, %p92
      %s95 = sadd.s32 %s94, 1
      %p98 = scmp.eq.s32.totalorder %s18, 1
      %p99 = scmp.ne.s32.totalorder %s94, %s96
      %p100 = scmp.eq.s32.totalorder %s18, 0
      %p101 = por %p99, %p100
      %p102 = scmp.ne.s32.totalorder %s94, %s96
      %p103 = scmp.eq.s32.totalorder %s23, 1
      %p104 = por %p102, %p103
      %p105 = scmp.ne.s32.totalorder %s96, %s97
      %p106 = scmp.eq.s32.totalorder %s23, 0
      %p107 = por %p105, %p106
      %p108 = scmp.ne.s32.totalorder %s96, %s97
      %p109 = scmp.eq.s32.totalorder %s24, 1
      %p110 = por %p108, %p109
      %p112 = scmp.ne.s32.totalorder %s97, %s111
      %p113 = scmp.eq.s32.totalorder %s24, 0
      %p114 = por %p112, %p113
      %s116 = sadd.s32 %s115, 1
      %p119 = scmp.eq.s32.totalorder %s18, 1
      %p120 = scmp.ne.s32.totalorder %s115, %s117
      %p121 = scmp.eq.s32.totalorder %s18, 0
      %p122 = por %p120, %p121
      %p123 = scmp.ne.s32.totalorder %s115, %s117
      %p124 = scmp.eq.s32.totalorder %s23, 1
      %p125 = por %p123, %p124
      %p126 = scmp.ne.s32.totalorder %s117, %s118
      %p127 = scmp.eq.s32.totalorder %s23, 0
      %p128 = por %p126, %p127
      %p129 = scmp.ne.s32.totalorder %s117, %s118
      %p130 = scmp.eq.s32.totalorder %s24, 1
      %p131 = por %p129, %p130
      %p133 = scmp.ne.s32.totalorder %s118, %s132
      %p134 = scmp.eq.s32.totalorder %s24, 0
      %p135 = por %p133, %p134
      %s137 = sadd.s32 %s136, 1
      %p140 = scmp.eq.s32.totalorder %s18, 1
      %p141 = scmp.ne.s32.totalorder %s136, %s138
      %p142 = scmp.eq.s32.totalorder %s18, 0
      %p143 = por %p141, %p142
      %p144 = scmp.ne.s32.totalorder %s136, %s138
      %p145 = scmp.eq.s32.totalorder %s23, 1
      %p146 = por %p144, %p145
      %p147 = scmp.ne.s32.totalorder %s138, %s139
      %p148 = scmp.eq.s32.totalorder %s23, 0
      %p149 = por %p147, %p148
      %p150 = scmp.ne.s32.totalorder %s138, %s139
      %p151 = scmp.eq.s32.totalorder %s24, 1
      %p152 = por %p150, %p151
      %p154 = scmp.ne.s32.totalorder %s139, %s153
      %p155 = scmp.eq.s32.totalorder %s24, 0
      %p156 = por %p154, %p155
      %s158 = sadd.s32 %s157, 1
      %p161 = scmp.eq.s32.totalorder %s18, 1
      %p162 = scmp.ne.s32.totalorder %s157, %s159
      %p163 = scmp.eq.s32.totalorder %s18, 0
      %p164 = por %p162, %p163
      %p165 = scmp.ne.s32.totalorder %s157, %s159
      %p166 = scmp.eq.s32.totalorder %s23, 1
      %p167 = por %p165, %p166
      %p168 = scmp.ne.s32.totalorder %s159, %s160
      %p169 = scmp.eq.s32.totalorder %s23, 0
      %p170 = por %p168, %p169
      %p171 = scmp.ne.s32.totalorder %s159, %s160
      %p172 = scmp.eq.s32.totalorder %s24, 1
      %p173 = por %p171, %p172
      %p175 = scmp.ne.s32.totalorder %s160, %s174
      %p176 = scmp.eq.s32.totalorder %s24, 0
      %p177 = por %p175, %p176
      %s179 = sadd.s32 %s178, 1
      %p182 = scmp.eq.s32.totalorder %s18, 1
      %p183 = scmp.ne.s32.totalorder %s178, %s180
      %p184 = scmp.eq.s32.totalorder %s18, 0
      %p185 = por %p183, %p184
      %p186 = scmp.ne.s32.totalorder %s178, %s180
      %p187 = scmp.eq.s32.totalorder %s23, 1
      %p188 = por %p186, %p187
      %p189 = scmp.ne.s32.totalorder %s180, %s181
      %p190 = scmp.eq.s32.totalorder %s23, 0
      %p191 = por %p189, %p190
      %p192 = scmp.ne.s32.totalorder %s180, %s181
      %p193 = scmp.eq.s32.totalorder %s24, 1
      %p194 = por %p192, %p193
      %p196 = scmp.ne.s32.totalorder %s181, %s195
      %p197 = scmp.eq.s32.totalorder %s24, 0
      %p198 = por %p196, %p197
      %s200 = sadd.s32 %s199, 1
      %p203 = scmp.eq.s32.totalorder %s18, 1
      %p204 = scmp.ne.s32.totalorder %s199, %s201
      %p205 = scmp.eq.s32.totalorder %s18, 0
      %p206 = por %p204, %p205
      %p207 = scmp.ne.s32.totalorder %s199, %s201
      %p208 = scmp.eq.s32.totalorder %s23, 1
      %p209 = por %p207, %p208
      %p210 = scmp.ne.s32.totalorder %s201, %s202
      %p211 = scmp.eq.s32.totalorder %s23, 0
      %p212 = por %p210, %p211
      %p213 = scmp.ne.s32.totalorder %s201, %s202
      %p214 = scmp.eq.s32.totalorder %s24, 1
      %p215 = por %p213, %p214
      %p217 = scmp.ne.s32.totalorder %s202, %s216
      %p218 = scmp.eq.s32.totalorder %s24, 0
      %p219 = por %p217, %p218
      %s220 = ssub.s32 %s18, %s25
      %p221 = scmp.eq.s32.totalorder %s220, 0
      %s223 = sadd.s32 %s222, 1
      %s224 = scalar_select %p221, %s222, %s223
      %p227 = pneg %p221
      %p228 = scmp.eq.s32.totalorder %s18, 1
      %p229 = por %p227, %p228
      %p230 = scmp.ne.s32.totalorder %s222, %s225
      %p231 = scmp.eq.s32.totalorder %s18, 0
      %p232 = por %p230, %p231
      %p233 = scmp.ne.s32.totalorder %s222, %s225
      %p234 = scmp.eq.s32.totalorder %s23, 1
      %p235 = por %p233, %p234
      %p236 = scmp.ne.s32.totalorder %s225, %s226
      %p237 = scmp.eq.s32.totalorder %s23, 0
      %p238 = por %p236, %p237
      %p239 = scmp.ne.s32.totalorder %s225, %s226
      %p240 = scmp.eq.s32.totalorder %s24, 1
      %p241 = por %p239, %p240
      %p243 = scmp.ne.s32.totalorder %s226, %s242
      %p244 = scmp.eq.s32.totalorder %s24, 0
      %p245 = por %p243, %p244
      %p246 = scmp.le.s32.totalorder 1, %s18
      %p247 = scmp.lt.s32.totalorder %s18, 3
      %p248 = pnand %p246, %p247
      %p249 = pneg %p248
      // Predicated region
      $region9: #{tpu_custom_call.1} parent=5 // pred_check
        _
      $region10: #{tpu_custom_call.1} parent=5 // pred_check_branch
        %251 = sbr.rel (%p248) target = $region12
      $region11: #{tpu_custom_call.1} parent=5 // pred_region
        %s252 = ssub.s32 %s18, 1
        // Predicated region
        $region13: #{tpu_custom_call.1} parent=11 // pred_check
          %p253 = pneg %p65
        $region14: #{tpu_custom_call.1} parent=11 // pred_check_branch
          %255 = sbr.rel (%p253) target = $region16
        $region15: #{tpu_custom_call.1} parent=11 // pred_region
          _
        $region16: #{tpu_custom_call.1} parent=11 // pred_fallthru
          _
        // Predicated region
        $region17: #{tpu_custom_call.1} parent=11 // pred_check
          %p256 = pneg %p86
        $region18: #{tpu_custom_call.1} parent=11 // pred_check_branch
          %258 = sbr.rel (%p256) target = $region20
        $region19: #{tpu_custom_call.1} parent=11 // pred_region
          _
        $region20: #{tpu_custom_call.1} parent=11 // pred_fallthru
          _
        // Predicated region
        $region21: #{tpu_custom_call.1} parent=11 // pred_check
          %p259 = pneg %p107
        $region22: #{tpu_custom_call.1} parent=11 // pred_check_branch
          %261 = sbr.rel (%p259) target = $region24
        $region23: #{tpu_custom_call.1} parent=11 // pred_region
          _
        $region24: #{tpu_custom_call.1} parent=11 // pred_fallthru
          _
        // Predicated region
        $region25: #{tpu_custom_call.1} parent=11 // pred_check
          %p262 = pneg %p128
        $region26: #{tpu_custom_call.1} parent=11 // pred_check_branch
          %264 = sbr.rel (%p262) target = $region28
        $region27: #{tpu_custom_call.1} parent=11 // pred_region
          _
        $region28: #{tpu_custom_call.1} parent=11 // pred_fallthru
          _
        // Predicated region
        $region29: #{tpu_custom_call.1} parent=11 // pred_check
          %p265 = pneg %p149
        $region30: #{tpu_custom_call.1} parent=11 // pred_check_branch
          %267 = sbr.rel (%p265) target = $region32
        $region31: #{tpu_custom_call.1} parent=11 // pred_region
          _
        $region32: #{tpu_custom_call.1} parent=11 // pred_fallthru
          _
        // Predicated region
        $region33: #{tpu_custom_call.1} parent=11 // pred_check
          %p268 = pneg %p170
        $region34: #{tpu_custom_call.1} parent=11 // pred_check_branch
          %270 = sbr.rel (%p268) target = $region36
        $region35: #{tpu_custom_call.1} parent=11 // pred_region
          _
        $region36: #{tpu_custom_call.1} parent=11 // pred_fallthru
          _
        // Predicated region
        $region37: #{tpu_custom_call.1} parent=11 // pred_check
          %p271 = pneg %p191
        $region38: #{tpu_custom_call.1} parent=11 // pred_check_branch
          %273 = sbr.rel (%p271) target = $region40
        $region39: #{tpu_custom_call.1} parent=11 // pred_region
          _
        $region40: #{tpu_custom_call.1} parent=11 // pred_fallthru
          _
        // Predicated region
        $region41: #{tpu_custom_call.1} parent=11 // pred_check
          %p274 = pneg %p212
        $region42: #{tpu_custom_call.1} parent=11 // pred_check_branch
          %276 = sbr.rel (%p274) target = $region44
        $region43: #{tpu_custom_call.1} parent=11 // pred_region
          _
        $region44: #{tpu_custom_call.1} parent=11 // pred_fallthru
          _
      $region12: #{tpu_custom_call.1} parent=5 // pred_fallthru
        _
      %p277 = scmp.lt.s32.totalorder %s18, 2
      // Predicated region
      $region45: #{tpu_custom_call.1} parent=5 // pred_check
        %p278 = pneg %p277
      $region46: #{tpu_custom_call.1} parent=5 // pred_check_branch
        %280 = sbr.rel (%p278) target = $region48
      $region47: #{tpu_custom_call.1} parent=5 // pred_region
        // Predicated region
        $region49: #{tpu_custom_call.1} parent=47 // pred_check
          %p281 = pneg %p38
        $region50: #{tpu_custom_call.1} parent=47 // pred_check_branch
          %283 = sbr.rel (%p281) target = $region52
        $region51: #{tpu_custom_call.1} parent=47 // pred_region
          %s284 = smul.u32 64, %s18
          %p285 = scmp.lt.s32.totalorder %s284, 127
          %s286 = scalar_select %p285, %s284, 127
          %s287 = smul.addr %s286, 4
          %s288 = scalar_lea.vmem %s0, %s287
          %s289 = smul.u32 64, %s18
        $region52: #{tpu_custom_call.1} parent=47 // pred_fallthru
          _
      $region48: #{tpu_custom_call.1} parent=5 // pred_fallthru
        _
      %p290 = scmp.le.s32.totalorder 1, %s18
      %p291 = scmp.lt.s32.totalorder %s18, 3
      %p292 = pnand %p290, %p291
      %p293 = pneg %p292
      // Predicated region
      $region53: #{tpu_custom_call.1} parent=5 // pred_check
        _
      $region54: #{tpu_custom_call.1} parent=5 // pred_check_branch
        %295 = sbr.rel (%p292) target = $region56
      $region55: #{tpu_custom_call.1} parent=5 // pred_region
        %s296 = ssub.s32 %s18, 1
        %s297 = smul.u32 64, %s23
        %p298 = scmp.lt.s32.totalorder %s297, 127
        %s299 = scalar_select %p298, %s297, 127
        %s300 = smul.addr %s299, 4
        %s301 = scalar_lea.vmem %s0, %s300
        %p302 = pneg %p44
        %p303 = pneg %p41
        %p304 = pneg %p65
        %p305 = pneg %p62
        %p306 = pneg %p86
        %p307 = pneg %p83
        %p308 = pneg %p107
        %p309 = pneg %p104
        %p310 = pneg %p128
        %p311 = pneg %p125
        %p312 = pneg %p149
        %p313 = pneg %p146
        %p314 = pneg %p170
        %p315 = pneg %p167
        %p316 = pneg %p191
        %p317 = pneg %p188
        %p318 = pneg %p212
        %p319 = pneg %p209
        %p320 = pneg %p238
        %p321 = pneg %p235
        %s322 = sand.u32 %s225, 1
        %s323 = scalar_lea.sflag [#allocation3], %s322
        %s324 = sand.u32 %s225, 1
        %s325 = smul.addr %s324, 512
        %s326 = scalar_lea.vmem [#allocation2], %s325
        %s327 = smul.u32 64, %s23
        %p328 = scmp.lt.s32.totalorder %s327, 127
        %s329 = scalar_select %p328, %s327, 127
        %s330 = smul.addr %s329, 4
        %s331 = scalar_lea.vmem %s0, %s330
        %s332 = smul.u32 64, %s23
        %s333 = smul.u32 64, %s23
        %v335 = vld [vmem:[%s331] sm:$0xf]
        %v336 = vld [vmem:[%s331 + $0x4] sm:$0xf]
        %v337 = vld [vmem:[%s331 + $0x8] sm:$0xf]
        %v338 = vld [vmem:[%s331 + $0xc] sm:$0xf]
        %v339 = vld [vmem:[%s331 + $0x10] sm:$0xf]
        %v340 = vld [vmem:[%s331 + $0x14] sm:$0xf]
        %v341 = vld [vmem:[%s331 + $0x18] sm:$0xf]
        %v342 = vld [vmem:[%s331 + $0x1c] sm:$0xf]
        %v343 = vld [vmem:[%s331 + $0x20] sm:$0xf]
        %v344 = vld [vmem:[%s331 + $0x24] sm:$0xf]
        %v345 = vld [vmem:[%s331 + $0x28] sm:$0xf]
        %v346 = vld [vmem:[%s331 + $0x2c] sm:$0xf]
        %v347 = vld [vmem:[%s331 + $0x30] sm:$0xf]
        %v348 = vld [vmem:[%s331 + $0x34] sm:$0xf]
        %v349 = vld [vmem:[%s331 + $0x38] sm:$0xf]
        %v350 = vld [vmem:[%s331 + $0x3c] sm:$0xf]
        %v351 = vld [vmem:[%s331 + $0x40] sm:$0xf]
        %v352 = vld [vmem:[%s331 + $0x44] sm:$0xf]
        %v353 = vld [vmem:[%s331 + $0x48] sm:$0xf]
        %v354 = vld [vmem:[%s331 + $0x4c] sm:$0xf]
        %v355 = vld [vmem:[%s331 + $0x50] sm:$0xf]
        %v356 = vld [vmem:[%s331 + $0x54] sm:$0xf]
        %v357 = vld [vmem:[%s331 + $0x58] sm:$0xf]
        %v358 = vld [vmem:[%s331 + $0x5c] sm:$0xf]
        %v359 = vld [vmem:[%s331 + $0x60] sm:$0xf]
        %v360 = vld [vmem:[%s331 + $0x64] sm:$0xf]
        %v361 = vld [vmem:[%s331 + $0x68] sm:$0xf]
        %v362 = vld [vmem:[%s331 + $0x6c] sm:$0xf]
        %v363 = vld [vmem:[%s331 + $0x70] sm:$0xf]
        %v364 = vld [vmem:[%s331 + $0x74] sm:$0xf]
        %v365 = vld [vmem:[%s331 + $0x78] sm:$0xf]
        %v366 = vld [vmem:[%s331 + $0x7c] sm:$0xf]
        %v367 = vld [vmem:[%s331 + $0x80] sm:$0xf]
        %v368 = vld [vmem:[%s331 + $0x84] sm:$0xf]
        %v369 = vld [vmem:[%s331 + $0x88] sm:$0xf]
        %v370 = vld [vmem:[%s331 + $0x8c] sm:$0xf]
        %v371 = vld [vmem:[%s331 + $0x90] sm:$0xf]
        %v372 = vld [vmem:[%s331 + $0x94] sm:$0xf]
        %v373 = vld [vmem:[%s331 + $0x98] sm:$0xf]
        %v374 = vld [vmem:[%s331 + $0x9c] sm:$0xf]
        %v375 = vld [vmem:[%s331 + $0xa0] sm:$0xf]
        %v376 = vld [vmem:[%s331 + $0xa4] sm:$0xf]
        %v377 = vld [vmem:[%s331 + $0xa8] sm:$0xf]
        %v378 = vld [vmem:[%s331 + $0xac] sm:$0xf]
        %v379 = vld [vmem:[%s331 + $0xb0] sm:$0xf]
        %v380 = vld [vmem:[%s331 + $0xb4] sm:$0xf]
        %v381 = vld [vmem:[%s331 + $0xb8] sm:$0xf]
        %v382 = vld [vmem:[%s331 + $0xbc] sm:$0xf]
        %v383 = vld [vmem:[%s331 + $0xc0] sm:$0xf]
        %v384 = vld [vmem:[%s331 + $0xc4] sm:$0xf]
        %v385 = vld [vmem:[%s331 + $0xc8] sm:$0xf]
        %v386 = vld [vmem:[%s331 + $0xcc] sm:$0xf]
        %v387 = vld [vmem:[%s331 + $0xd0] sm:$0xf]
        %v388 = vld [vmem:[%s331 + $0xd4] sm:$0xf]
        %v389 = vld [vmem:[%s331 + $0xd8] sm:$0xf]
        %v390 = vld [vmem:[%s331 + $0xdc] sm:$0xf]
        %v391 = vld [vmem:[%s331 + $0xe0] sm:$0xf]
        %v392 = vld [vmem:[%s331 + $0xe4] sm:$0xf]
        %v393 = vld [vmem:[%s331 + $0xe8] sm:$0xf]
        %v394 = vld [vmem:[%s331 + $0xec] sm:$0xf]
        %v395 = vld [vmem:[%s331 + $0xf0] sm:$0xf]
        %v396 = vld [vmem:[%s331 + $0xf4] sm:$0xf]
        %v397 = vld [vmem:[%s331 + $0xf8] sm:$0xf]
        %v398 = vld [vmem:[%s331 + $0xfc] sm:$0xf]
        %v399 = vld [vmem:[%s1] sm:$0xff]
        %v400 = vld [vmem:[%s1 + $0x8] sm:$0xff]
        %v401 = vld [vmem:[%s1 + $0x10] sm:$0xff]
        %v402 = vld [vmem:[%s1 + $0x18] sm:$0xff]
        %v403 = vld [vmem:[%s1 + $0x20] sm:$0xff]
        %v404 = vld [vmem:[%s1 + $0x28] sm:$0xff]
        %v405 = vld [vmem:[%s1 + $0x30] sm:$0xff]
        %v406 = vld [vmem:[%s1 + $0x38] sm:$0xff]
        %v407 = vld [vmem:[%s2] sm:$0x3]
        %v409 = vlaneseq
        %v410 = vshrl.u32 %v409, 7
        %v411 = vsub.s32 0, %v410
        %v412 = vrot.slane %v407, %v411
        %v413 = vlaneseq
        %v414 = vshrl.u32 %v413, 7
        %v415 = vsub.s32 1, %v414
        %v416 = vrot.slane %v407, %v415
        %v483 = vunpack.c.l.b16 %v335
        %v484 = vunpack.c.l.b16 %v336
        %v485 = vunpack.c.l.b16 %v337
        %v486 = vunpack.c.l.b16 %v338
        %v487 = vunpack.c.l.b16 %v339
        %v488 = vunpack.c.l.b16 %v340
        %v489 = vunpack.c.l.b16 %v341
        %v490 = vunpack.c.l.b16 %v342
        %v491 = vunpack.c.l.b16 %v343
        %v492 = vunpack.c.l.b16 %v344
        %v493 = vunpack.c.l.b16 %v345
        %v494 = vunpack.c.l.b16 %v346
        %v495 = vunpack.c.l.b16 %v347
        %v496 = vunpack.c.l.b16 %v348
        %v497 = vunpack.c.l.b16 %v349
        %v498 = vunpack.c.l.b16 %v350
        %v499 = vunpack.c.l.b16 %v351
        %v500 = vunpack.c.l.b16 %v352
        %v501 = vunpack.c.l.b16 %v353
        %v502 = vunpack.c.l.b16 %v354
        %v503 = vunpack.c.l.b16 %v355
        %v504 = vunpack.c.l.b16 %v356
        %v505 = vunpack.c.l.b16 %v357
        %v506 = vunpack.c.l.b16 %v358
        %v507 = vunpack.c.l.b16 %v359
        %v508 = vunpack.c.l.b16 %v360
        %v509 = vunpack.c.l.b16 %v361
        %v510 = vunpack.c.l.b16 %v362
        %v511 = vunpack.c.l.b16 %v363
        %v512 = vunpack.c.l.b16 %v364
        %v513 = vunpack.c.l.b16 %v365
        %v514 = vunpack.c.l.b16 %v366
        %v515 = vunpack.c.l.b16 %v367
        %v516 = vunpack.c.l.b16 %v368
        %v517 = vunpack.c.l.b16 %v369
        %v518 = vunpack.c.l.b16 %v370
        %v519 = vunpack.c.l.b16 %v371
        %v520 = vunpack.c.l.b16 %v372
        %v521 = vunpack.c.l.b16 %v373
        %v522 = vunpack.c.l.b16 %v374
        %v523 = vunpack.c.l.b16 %v375
        %v524 = vunpack.c.l.b16 %v376
        %v525 = vunpack.c.l.b16 %v377
        %v526 = vunpack.c.l.b16 %v378
        %v527 = vunpack.c.l.b16 %v379
        %v528 = vunpack.c.l.b16 %v380
        %v529 = vunpack.c.l.b16 %v381
        %v530 = vunpack.c.l.b16 %v382
        %v531 = vunpack.c.l.b16 %v383
        %v532 = vunpack.c.l.b16 %v384
        %v533 = vunpack.c.l.b16 %v385
        %v534 = vunpack.c.l.b16 %v386
        %v535 = vunpack.c.l.b16 %v387
        %v536 = vunpack.c.l.b16 %v388
        %v537 = vunpack.c.l.b16 %v389
        %v538 = vunpack.c.l.b16 %v390
        %v539 = vunpack.c.l.b16 %v391
        %v540 = vunpack.c.l.b16 %v392
        %v541 = vunpack.c.l.b16 %v393
        %v542 = vunpack.c.l.b16 %v394
        %v543 = vunpack.c.l.b16 %v395
        %v544 = vunpack.c.l.b16 %v396
        %v545 = vunpack.c.l.b16 %v397
        %v546 = vunpack.c.l.b16 %v398
        %v547 = vpack.c.b16 %v484, %v483
        %v548 = vpack.c.b16 %v486, %v485
        %v549 = vpack.c.b16 %v488, %v487
        %v550 = vpack.c.b16 %v490, %v489
        %v551 = vpack.c.b16 %v492, %v491
        %v552 = vpack.c.b16 %v494, %v493
        %v553 = vpack.c.b16 %v496, %v495
        %v554 = vpack.c.b16 %v498, %v497
        %v555 = vpack.c.b16 %v500, %v499
        %v556 = vpack.c.b16 %v502, %v501
        %v557 = vpack.c.b16 %v504, %v503
        %v558 = vpack.c.b16 %v506, %v505
        %v559 = vpack.c.b16 %v508, %v507
        %v560 = vpack.c.b16 %v510, %v509
        %v561 = vpack.c.b16 %v512, %v511
        %v562 = vpack.c.b16 %v514, %v513
        %v563 = vpack.c.b16 %v516, %v515
        %v564 = vpack.c.b16 %v518, %v517
        %v565 = vpack.c.b16 %v520, %v519
        %v566 = vpack.c.b16 %v522, %v521
        %v567 = vpack.c.b16 %v524, %v523
        %v568 = vpack.c.b16 %v526, %v525
        %v569 = vpack.c.b16 %v528, %v527
        %v570 = vpack.c.b16 %v530, %v529
        %v571 = vpack.c.b16 %v532, %v531
        %v572 = vpack.c.b16 %v534, %v533
        %v573 = vpack.c.b16 %v536, %v535
        %v574 = vpack.c.b16 %v538, %v537
        %v575 = vpack.c.b16 %v540, %v539
        %v576 = vpack.c.b16 %v542, %v541
        %v577 = vpack.c.b16 %v544, %v543
        %v578 = vpack.c.b16 %v546, %v545
        %v587 = vunpack.c.l.b16 %v399
        %v588 = vunpack.c.h.b16 %v399
        %v589 = vunpack.c.l.b16 %v400
        %v590 = vunpack.c.h.b16 %v400
        %v591 = vunpack.c.l.b16 %v401
        %v592 = vunpack.c.h.b16 %v401
        %v593 = vunpack.c.l.b16 %v402
        %v594 = vunpack.c.h.b16 %v402
        %v595 = vunpack.c.l.b16 %v403
        %v596 = vunpack.c.h.b16 %v403
        %v597 = vunpack.c.l.b16 %v404
        %v598 = vunpack.c.h.b16 %v404
        %v599 = vunpack.c.l.b16 %v405
        %v600 = vunpack.c.h.b16 %v405
        %v601 = vunpack.c.l.b16 %v406
        %v602 = vunpack.c.h.b16 %v406
        %v603 = vpack.c.b16 %v589, %v587
        %v604 = vpack.c.b16 %v590, %v588
        %v605 = vpack.c.b16 %v593, %v591
        %v606 = vpack.c.b16 %v594, %v592
        %v607 = vpack.c.b16 %v597, %v595
        %v608 = vpack.c.b16 %v598, %v596
        %v609 = vpack.c.b16 %v601, %v599
        %v610 = vpack.c.b16 %v602, %v600
        %vm619 = vcmask 523264
        %v621 = vsel %vm619, %v547, 0
        %v624 = vsel %vm619, %v548, 0
        %v627 = vsel %vm619, %v549, 0
        %v630 = vsel %vm619, %v550, 0
        %v633 = vsel %vm619, %v551, 0
        %v636 = vsel %vm619, %v552, 0
        %v639 = vsel %vm619, %v553, 0
        %v642 = vsel %vm619, %v554, 0
        %v645 = vsel %vm619, %v555, 0
        %v648 = vsel %vm619, %v556, 0
        %v651 = vsel %vm619, %v557, 0
        %v654 = vsel %vm619, %v558, 0
        %v657 = vsel %vm619, %v559, 0
        %v660 = vsel %vm619, %v560, 0
        %v663 = vsel %vm619, %v561, 0
        %v666 = vsel %vm619, %v562, 0
        %v669 = vsel %vm619, %v563, 0
        %v672 = vsel %vm619, %v564, 0
        %v675 = vsel %vm619, %v565, 0
        %v678 = vsel %vm619, %v566, 0
        %v681 = vsel %vm619, %v567, 0
        %v684 = vsel %vm619, %v568, 0
        %v687 = vsel %vm619, %v569, 0
        %v690 = vsel %vm619, %v570, 0
        %v693 = vsel %vm619, %v571, 0
        %v696 = vsel %vm619, %v572, 0
        %v699 = vsel %vm619, %v573, 0
        %v702 = vsel %vm619, %v574, 0
        %v705 = vsel %vm619, %v575, 0
        %v708 = vsel %vm619, %v576, 0
        %v711 = vsel %vm619, %v577, 0
        %v714 = vsel %vm619, %v578, 0
        %716 = vmatprep.subr.bf16.mxu0 0
        %717 = vmatpush1.bf16.msra.mxu0 0
        %718 = vmatprep.subr.bf16.mxu0 0
        %719 = vmatpush1.bf16.msra.mxu0 0
        %720 = vmatprep.subr.bf16.mxu0 0
        %721 = vmatpush1.bf16.msra.mxu0 0
        %722 = vmatprep.subr.bf16.mxu0 0
        %723 = vmatpush1.bf16.msra.mxu0 0
        %724 = vmatprep.subr.bf16.mxu0 %v610
        %725 = vmatpush1.bf16.msra.mxu0 %v609
        %726 = vmatprep.subr.bf16.mxu0 %v608
        %727 = vmatpush1.bf16.msra.mxu0 %v607
        %728 = vmatprep.subr.bf16.mxu0 %v606
        %729 = vmatpush1.bf16.msra.mxu0 %v605
        %730 = vmatprep.subr.bf16.mxu0 %v604
        %731 = vmatpush1.bf16.msra.mxu0 %v603
        %732 = vmatprep.subr.bf16.mxu0 0
        %733 = vmatpush2.bf16.msra.mxu0 0
        %734 = vmatprep.subr.bf16.mxu0 0
        %735 = vmatpush2.bf16.msra.mxu0 0
        %736 = vmatprep.subr.bf16.mxu0 0
        %737 = vmatpush2.bf16.msra.mxu0 0
        %738 = vmatprep.subr.bf16.mxu0 0
        %739 = vmatpush2.bf16.msra.mxu0 0
        %740 = vmatprep.subr.bf16.mxu0 0
        %741 = vmatpush2.bf16.msra.mxu0 0
        %742 = vmatprep.subr.bf16.mxu0 0
        %743 = vmatpush2.bf16.msra.mxu0 0
        %744 = vmatprep.subr.bf16.mxu0 0
        %745 = vmatpush2.bf16.msra.mxu0 0
        %746 = vmatprep.subr.bf16.mxu0 0
        %747 = vmatpush2.bf16.msra.mxu0 0
        %748 = vmatprep.mubr.bf16.mxu0 0
        %749 = vmatmul.mubr.bf16.gmra.mxu0 %v621
        %v750 = vpop.f32.mrf.mxu0
        %v751 = vadd.f32 %v412, %v750
        %v752 = vpop.f32.mrf.mxu0
        %v753 = vadd.f32 %v416, %v752
        %v754 = vpop.f32.mrf.mxu0
        %v755 = vadd.f32 %v412, %v754
        %v756 = vpop.f32.mrf.mxu0
        %v757 = vadd.f32 %v416, %v756
        %758 = vmatprep.mubr.bf16.mxu0 0
        %759 = vmatmul.mubr.bf16.gmra.mxu0 %v624
        %v760 = vpop.f32.mrf.mxu0
        %v761 = vadd.f32 %v412, %v760
        %v762 = vpop.f32.mrf.mxu0
        %v763 = vadd.f32 %v416, %v762
        %v764 = vpop.f32.mrf.mxu0
        %v765 = vadd.f32 %v412, %v764
        %v766 = vpop.f32.mrf.mxu0
        %v767 = vadd.f32 %v416, %v766
        %768 = vmatprep.mubr.bf16.mxu0 0
        %769 = vmatmul.mubr.bf16.gmra.mxu0 %v627
        %v770 = vpop.f32.mrf.mxu0
        %v771 = vadd.f32 %v412, %v770
        %v772 = vpop.f32.mrf.mxu0
        %v773 = vadd.f32 %v416, %v772
        %v774 = vpop.f32.mrf.mxu0
        %v775 = vadd.f32 %v412, %v774
        %v776 = vpop.f32.mrf.mxu0
        %v777 = vadd.f32 %v416, %v776
        %778 = vmatprep.mubr.bf16.mxu0 0
        %779 = vmatmul.mubr.bf16.gmra.mxu0 %v630
        %v780 = vpop.f32.mrf.mxu0
        %v781 = vadd.f32 %v412, %v780
        %v782 = vpop.f32.mrf.mxu0
        %v783 = vadd.f32 %v416, %v782
        %v784 = vpop.f32.mrf.mxu0
        %v785 = vadd.f32 %v412, %v784
        %v786 = vpop.f32.mrf.mxu0
        %v787 = vadd.f32 %v416, %v786
        %788 = vmatprep.mubr.bf16.mxu0 0
        %789 = vmatmul.mubr.bf16.gmra.mxu0 %v633
        %v790 = vpop.f32.mrf.mxu0
        %v791 = vadd.f32 %v412, %v790
        %v792 = vpop.f32.mrf.mxu0
        %v793 = vadd.f32 %v416, %v792
        %v794 = vpop.f32.mrf.mxu0
        %v795 = vadd.f32 %v412, %v794
        %v796 = vpop.f32.mrf.mxu0
        %v797 = vadd.f32 %v416, %v796
        %798 = vmatprep.mubr.bf16.mxu0 0
        %799 = vmatmul.mubr.bf16.gmra.mxu0 %v636
        %v800 = vpop.f32.mrf.mxu0
        %v801 = vadd.f32 %v412, %v800
        %v802 = vpop.f32.mrf.mxu0
        %v803 = vadd.f32 %v416, %v802
        %v804 = vpop.f32.mrf.mxu0
        %v805 = vadd.f32 %v412, %v804
        %v806 = vpop.f32.mrf.mxu0
        %v807 = vadd.f32 %v416, %v806
        %808 = vmatprep.mubr.bf16.mxu0 0
        %809 = vmatmul.mubr.bf16.gmra.mxu0 %v639
        %v810 = vpop.f32.mrf.mxu0
        %v811 = vadd.f32 %v412, %v810
        %v812 = vpop.f32.mrf.mxu0
        %v813 = vadd.f32 %v416, %v812
        %v814 = vpop.f32.mrf.mxu0
        %v815 = vadd.f32 %v412, %v814
        %v816 = vpop.f32.mrf.mxu0
        %v817 = vadd.f32 %v416, %v816
        %818 = vmatprep.mubr.bf16.mxu0 0
        %819 = vmatmul.mubr.bf16.gmra.mxu0 %v642
        %v820 = vpop.f32.mrf.mxu0
        %v821 = vadd.f32 %v412, %v820
        %v822 = vpop.f32.mrf.mxu0
        %v823 = vadd.f32 %v416, %v822
        %v824 = vpop.f32.mrf.mxu0
        %v825 = vadd.f32 %v412, %v824
        %v826 = vpop.f32.mrf.mxu0
        %v827 = vadd.f32 %v416, %v826
        %828 = vmatprep.mubr.bf16.mxu0 0
        %829 = vmatmul.mubr.bf16.gmra.mxu0 %v645
        %v830 = vpop.f32.mrf.mxu0
        %v831 = vadd.f32 %v412, %v830
        %v832 = vpop.f32.mrf.mxu0
        %v833 = vadd.f32 %v416, %v832
        %v834 = vpop.f32.mrf.mxu0
        %v835 = vadd.f32 %v412, %v834
        %v836 = vpop.f32.mrf.mxu0
        %v837 = vadd.f32 %v416, %v836
        %838 = vmatprep.mubr.bf16.mxu0 0
        %839 = vmatmul.mubr.bf16.gmra.mxu0 %v648
        %v840 = vpop.f32.mrf.mxu0
        %v841 = vadd.f32 %v412, %v840
        %v842 = vpop.f32.mrf.mxu0
        %v843 = vadd.f32 %v416, %v842
        %v844 = vpop.f32.mrf.mxu0
        %v845 = vadd.f32 %v412, %v844
        %v846 = vpop.f32.mrf.mxu0
        %v847 = vadd.f32 %v416, %v846
        %848 = vmatprep.mubr.bf16.mxu0 0
        %849 = vmatmul.mubr.bf16.gmra.mxu0 %v651
        %v850 = vpop.f32.mrf.mxu0
        %v851 = vadd.f32 %v412, %v850
        %v852 = vpop.f32.mrf.mxu0
        %v853 = vadd.f32 %v416, %v852
        %v854 = vpop.f32.mrf.mxu0
        %v855 = vadd.f32 %v412, %v854
        %v856 = vpop.f32.mrf.mxu0
        %v857 = vadd.f32 %v416, %v856
        %858 = vmatprep.mubr.bf16.mxu0 0
        %859 = vmatmul.mubr.bf16.gmra.mxu0 %v654
        %v860 = vpop.f32.mrf.mxu0
        %v861 = vadd.f32 %v412, %v860
        %v862 = vpop.f32.mrf.mxu0
        %v863 = vadd.f32 %v416, %v862
        %v864 = vpop.f32.mrf.mxu0
        %v865 = vadd.f32 %v412, %v864
        %v866 = vpop.f32.mrf.mxu0
        %v867 = vadd.f32 %v416, %v866
        %868 = vmatprep.mubr.bf16.mxu0 0
        %869 = vmatmul.mubr.bf16.gmra.mxu0 %v657
        %v870 = vpop.f32.mrf.mxu0
        %v871 = vadd.f32 %v412, %v870
        %v872 = vpop.f32.mrf.mxu0
        %v873 = vadd.f32 %v416, %v872
        %v874 = vpop.f32.mrf.mxu0
        %v875 = vadd.f32 %v412, %v874
        %v876 = vpop.f32.mrf.mxu0
        %v877 = vadd.f32 %v416, %v876
        %878 = vmatprep.mubr.bf16.mxu0 0
        %879 = vmatmul.mubr.bf16.gmra.mxu0 %v660
        %v880 = vpop.f32.mrf.mxu0
        %v881 = vadd.f32 %v412, %v880
        %v882 = vpop.f32.mrf.mxu0
        %v883 = vadd.f32 %v416, %v882
        %v884 = vpop.f32.mrf.mxu0
        %v885 = vadd.f32 %v412, %v884
        %v886 = vpop.f32.mrf.mxu0
        %v887 = vadd.f32 %v416, %v886
        %888 = vmatprep.mubr.bf16.mxu0 0
        %889 = vmatmul.mubr.bf16.gmra.mxu0 %v663
        %v890 = vpop.f32.mrf.mxu0
        %v891 = vadd.f32 %v412, %v890
        %v892 = vpop.f32.mrf.mxu0
        %v893 = vadd.f32 %v416, %v892
        %v894 = vpop.f32.mrf.mxu0
        %v895 = vadd.f32 %v412, %v894
        %v896 = vpop.f32.mrf.mxu0
        %v897 = vadd.f32 %v416, %v896
        %898 = vmatprep.mubr.bf16.mxu0 0
        %899 = vmatmul.mubr.bf16.gmra.mxu0 %v666
        %v900 = vpop.f32.mrf.mxu0
        %v901 = vadd.f32 %v412, %v900
        %v902 = vpop.f32.mrf.mxu0
        %v903 = vadd.f32 %v416, %v902
        %v904 = vpop.f32.mrf.mxu0
        %v905 = vadd.f32 %v412, %v904
        %v906 = vpop.f32.mrf.mxu0
        %v907 = vadd.f32 %v416, %v906
        %908 = vmatprep.mubr.bf16.mxu0 0
        %909 = vmatmul.mubr.bf16.gmra.mxu0 %v669
        %v910 = vpop.f32.mrf.mxu0
        %v911 = vadd.f32 %v412, %v910
        %v912 = vpop.f32.mrf.mxu0
        %v913 = vadd.f32 %v416, %v912
        %v914 = vpop.f32.mrf.mxu0
        %v915 = vadd.f32 %v412, %v914
        %v916 = vpop.f32.mrf.mxu0
        %v917 = vadd.f32 %v416, %v916
        %918 = vmatprep.mubr.bf16.mxu0 0
        %919 = vmatmul.mubr.bf16.gmra.mxu0 %v672
        %v920 = vpop.f32.mrf.mxu0
        %v921 = vadd.f32 %v412, %v920
        %v922 = vpop.f32.mrf.mxu0
        %v923 = vadd.f32 %v416, %v922
        %v924 = vpop.f32.mrf.mxu0
        %v925 = vadd.f32 %v412, %v924
        %v926 = vpop.f32.mrf.mxu0
        %v927 = vadd.f32 %v416, %v926
        %928 = vmatprep.mubr.bf16.mxu0 0
        %929 = vmatmul.mubr.bf16.gmra.mxu0 %v675
        %v930 = vpop.f32.mrf.mxu0
        %v931 = vadd.f32 %v412, %v930
        %v932 = vpop.f32.mrf.mxu0
        %v933 = vadd.f32 %v416, %v932
        %v934 = vpop.f32.mrf.mxu0
        %v935 = vadd.f32 %v412, %v934
        %v936 = vpop.f32.mrf.mxu0
        %v937 = vadd.f32 %v416, %v936
        %938 = vmatprep.mubr.bf16.mxu0 0
        %939 = vmatmul.mubr.bf16.gmra.mxu0 %v678
        %v940 = vpop.f32.mrf.mxu0
        %v941 = vadd.f32 %v412, %v940
        %v942 = vpop.f32.mrf.mxu0
        %v943 = vadd.f32 %v416, %v942
        %v944 = vpop.f32.mrf.mxu0
        %v945 = vadd.f32 %v412, %v944
        %v946 = vpop.f32.mrf.mxu0
        %v947 = vadd.f32 %v416, %v946
        %948 = vmatprep.mubr.bf16.mxu0 0
        %949 = vmatmul.mubr.bf16.gmra.mxu0 %v681
        %v950 = vpop.f32.mrf.mxu0
        %v951 = vadd.f32 %v412, %v950
        %v952 = vpop.f32.mrf.mxu0
        %v953 = vadd.f32 %v416, %v952
        %v954 = vpop.f32.mrf.mxu0
        %v955 = vadd.f32 %v412, %v954
        %v956 = vpop.f32.mrf.mxu0
        %v957 = vadd.f32 %v416, %v956
        %958 = vmatprep.mubr.bf16.mxu0 0
        %959 = vmatmul.mubr.bf16.gmra.mxu0 %v684
        %v960 = vpop.f32.mrf.mxu0
        %v961 = vadd.f32 %v412, %v960
        %v962 = vpop.f32.mrf.mxu0
        %v963 = vadd.f32 %v416, %v962
        %v964 = vpop.f32.mrf.mxu0
        %v965 = vadd.f32 %v412, %v964
        %v966 = vpop.f32.mrf.mxu0
        %v967 = vadd.f32 %v416, %v966
        %968 = vmatprep.mubr.bf16.mxu0 0
        %969 = vmatmul.mubr.bf16.gmra.mxu0 %v687
        %v970 = vpop.f32.mrf.mxu0
        %v971 = vadd.f32 %v412, %v970
        %v972 = vpop.f32.mrf.mxu0
        %v973 = vadd.f32 %v416, %v972
        %v974 = vpop.f32.mrf.mxu0
        %v975 = vadd.f32 %v412, %v974
        %v976 = vpop.f32.mrf.mxu0
        %v977 = vadd.f32 %v416, %v976
        %978 = vmatprep.mubr.bf16.mxu0 0
        %979 = vmatmul.mubr.bf16.gmra.mxu0 %v690
        %v980 = vpop.f32.mrf.mxu0
        %v981 = vadd.f32 %v412, %v980
        %v982 = vpop.f32.mrf.mxu0
        %v983 = vadd.f32 %v416, %v982
        %v984 = vpop.f32.mrf.mxu0
        %v985 = vadd.f32 %v412, %v984
        %v986 = vpop.f32.mrf.mxu0
        %v987 = vadd.f32 %v416, %v986
        %988 = vmatprep.mubr.bf16.mxu0 0
        %989 = vmatmul.mubr.bf16.gmra.mxu0 %v693
        %v990 = vpop.f32.mrf.mxu0
        %v991 = vadd.f32 %v412, %v990
        %v992 = vpop.f32.mrf.mxu0
        %v993 = vadd.f32 %v416, %v992
        %v994 = vpop.f32.mrf.mxu0
        %v995 = vadd.f32 %v412, %v994
        %v996 = vpop.f32.mrf.mxu0
        %v997 = vadd.f32 %v416, %v996
        %998 = vmatprep.mubr.bf16.mxu0 0
        %999 = vmatmul.mubr.bf16.gmra.mxu0 %v696
        %v1000 = vpop.f32.mrf.mxu0
        %v1001 = vadd.f32 %v412, %v1000
        %v1002 = vpop.f32.mrf.mxu0
        %v1003 = vadd.f32 %v416, %v1002
        %v1004 = vpop.f32.mrf.mxu0
        %v1005 = vadd.f32 %v412, %v1004
        %v1006 = vpop.f32.mrf.mxu0
        %v1007 = vadd.f32 %v416, %v1006
        %1008 = vmatprep.mubr.bf16.mxu0 0
        %1009 = vmatmul.mubr.bf16.gmra.mxu0 %v699
        %v1010 = vpop.f32.mrf.mxu0
        %v1011 = vadd.f32 %v412, %v1010
        %v1012 = vpop.f32.mrf.mxu0
        %v1013 = vadd.f32 %v416, %v1012
        %v1014 = vpop.f32.mrf.mxu0
        %v1015 = vadd.f32 %v412, %v1014
        %v1016 = vpop.f32.mrf.mxu0
        %v1017 = vadd.f32 %v416, %v1016
        %1018 = vmatprep.mubr.bf16.mxu0 0
        %1019 = vmatmul.mubr.bf16.gmra.mxu0 %v702
        %v1020 = vpop.f32.mrf.mxu0
        %v1021 = vadd.f32 %v412, %v1020
        %v1022 = vpop.f32.mrf.mxu0
        %v1023 = vadd.f32 %v416, %v1022
        %v1024 = vpop.f32.mrf.mxu0
        %v1025 = vadd.f32 %v412, %v1024
        %v1026 = vpop.f32.mrf.mxu0
        %v1027 = vadd.f32 %v416, %v1026
        %1028 = vmatprep.mubr.bf16.mxu0 0
        %1029 = vmatmul.mubr.bf16.gmra.mxu0 %v705
        %v1030 = vpop.f32.mrf.mxu0
        %v1031 = vadd.f32 %v412, %v1030
        %v1032 = vpop.f32.mrf.mxu0
        %v1033 = vadd.f32 %v416, %v1032
        %v1034 = vpop.f32.mrf.mxu0
        %v1035 = vadd.f32 %v412, %v1034
        %v1036 = vpop.f32.mrf.mxu0
        %v1037 = vadd.f32 %v416, %v1036
        %1038 = vmatprep.mubr.bf16.mxu0 0
        %1039 = vmatmul.mubr.bf16.gmra.mxu0 %v708
        %v1040 = vpop.f32.mrf.mxu0
        %v1041 = vadd.f32 %v412, %v1040
        %v1042 = vpop.f32.mrf.mxu0
        %v1043 = vadd.f32 %v416, %v1042
        %v1044 = vpop.f32.mrf.mxu0
        %v1045 = vadd.f32 %v412, %v1044
        %v1046 = vpop.f32.mrf.mxu0
        %v1047 = vadd.f32 %v416, %v1046
        %1048 = vmatprep.mubr.bf16.mxu0 0
        %1049 = vmatmul.mubr.bf16.gmra.mxu0 %v711
        %v1050 = vpop.f32.mrf.mxu0
        %v1051 = vadd.f32 %v412, %v1050
        %v1052 = vpop.f32.mrf.mxu0
        %v1053 = vadd.f32 %v416, %v1052
        %v1054 = vpop.f32.mrf.mxu0
        %v1055 = vadd.f32 %v412, %v1054
        %v1056 = vpop.f32.mrf.mxu0
        %v1057 = vadd.f32 %v416, %v1056
        %1058 = vmatprep.mubr.bf16.mxu0 0
        %1059 = vmatmul.mubr.bf16.gmra.mxu0 %v714
        %v1060 = vpop.f32.mrf.mxu0
        %v1061 = vadd.f32 %v412, %v1060
        %v1062 = vpop.f32.mrf.mxu0
        %v1063 = vadd.f32 %v416, %v1062
        %v1064 = vpop.f32.mrf.mxu0
        %v1065 = vadd.f32 %v412, %v1064
        %v1066 = vpop.f32.mrf.mxu0
        %v1067 = vadd.f32 %v416, %v1066
        %1068 = vdwg.mxu0
        %v1069 = vmax.f32 %v751, 0.0
        %v1070 = vmax.f32 %v753, 0.0
        %v1071 = vmax.f32 %v755, 0.0
        %v1072 = vmax.f32 %v757, 0.0
        %v1073 = vmax.f32 %v761, 0.0
        %v1074 = vmax.f32 %v763, 0.0
        %v1075 = vmax.f32 %v765, 0.0
        %v1076 = vmax.f32 %v767, 0.0
        %v1077 = vmax.f32 %v771, 0.0
        %v1078 = vmax.f32 %v773, 0.0
        %v1079 = vmax.f32 %v775, 0.0
        %v1080 = vmax.f32 %v777, 0.0
        %v1081 = vmax.f32 %v781, 0.0
        %v1082 = vmax.f32 %v783, 0.0
        %v1083 = vmax.f32 %v785, 0.0
        %v1084 = vmax.f32 %v787, 0.0
        %v1085 = vmax.f32 %v791, 0.0
        %v1086 = vmax.f32 %v793, 0.0
        %v1087 = vmax.f32 %v795, 0.0
        %v1088 = vmax.f32 %v797, 0.0
        %v1089 = vmax.f32 %v801, 0.0
        %v1090 = vmax.f32 %v803, 0.0
        %v1091 = vmax.f32 %v805, 0.0
        %v1092 = vmax.f32 %v807, 0.0
        %v1093 = vmax.f32 %v811, 0.0
        %v1094 = vmax.f32 %v813, 0.0
        %v1095 = vmax.f32 %v815, 0.0
        %v1096 = vmax.f32 %v817, 0.0
        %v1097 = vmax.f32 %v821, 0.0
        %v1098 = vmax.f32 %v823, 0.0
        %v1099 = vmax.f32 %v825, 0.0
        %v1100 = vmax.f32 %v827, 0.0
        %v1101 = vmax.f32 %v831, 0.0
        %v1102 = vmax.f32 %v833, 0.0
        %v1103 = vmax.f32 %v835, 0.0
        %v1104 = vmax.f32 %v837, 0.0
        %v1105 = vmax.f32 %v841, 0.0
        %v1106 = vmax.f32 %v843, 0.0
        %v1107 = vmax.f32 %v845, 0.0
        %v1108 = vmax.f32 %v847, 0.0
        %v1109 = vmax.f32 %v851, 0.0
        %v1110 = vmax.f32 %v853, 0.0
        %v1111 = vmax.f32 %v855, 0.0
        %v1112 = vmax.f32 %v857, 0.0
        %v1113 = vmax.f32 %v861, 0.0
        %v1114 = vmax.f32 %v863, 0.0
        %v1115 = vmax.f32 %v865, 0.0
        %v1116 = vmax.f32 %v867, 0.0
        %v1117 = vmax.f32 %v871, 0.0
        %v1118 = vmax.f32 %v873, 0.0
        %v1119 = vmax.f32 %v875, 0.0
        %v1120 = vmax.f32 %v877, 0.0
        %v1121 = vmax.f32 %v881, 0.0
        %v1122 = vmax.f32 %v883, 0.0
        %v1123 = vmax.f32 %v885, 0.0
        %v1124 = vmax.f32 %v887, 0.0
        %v1125 = vmax.f32 %v891, 0.0
        %v1126 = vmax.f32 %v893, 0.0
        %v1127 = vmax.f32 %v895, 0.0
        %v1128 = vmax.f32 %v897, 0.0
        %v1129 = vmax.f32 %v901, 0.0
        %v1130 = vmax.f32 %v903, 0.0
        %v1131 = vmax.f32 %v905, 0.0
        %v1132 = vmax.f32 %v907, 0.0
        %v1133 = vmax.f32 %v911, 0.0
        %v1134 = vmax.f32 %v913, 0.0
        %v1135 = vmax.f32 %v915, 0.0
        %v1136 = vmax.f32 %v917, 0.0
        %v1137 = vmax.f32 %v921, 0.0
        %v1138 = vmax.f32 %v923, 0.0
        %v1139 = vmax.f32 %v925, 0.0
        %v1140 = vmax.f32 %v927, 0.0
        %v1141 = vmax.f32 %v931, 0.0
        %v1142 = vmax.f32 %v933, 0.0
        %v1143 = vmax.f32 %v935, 0.0
        %v1144 = vmax.f32 %v937, 0.0
        %v1145 = vmax.f32 %v941, 0.0
        %v1146 = vmax.f32 %v943, 0.0
        %v1147 = vmax.f32 %v945, 0.0
        %v1148 = vmax.f32 %v947, 0.0
        %v1149 = vmax.f32 %v951, 0.0
        %v1150 = vmax.f32 %v953, 0.0
        %v1151 = vmax.f32 %v955, 0.0
        %v1152 = vmax.f32 %v957, 0.0
        %v1153 = vmax.f32 %v961, 0.0
        %v1154 = vmax.f32 %v963, 0.0
        %v1155 = vmax.f32 %v965, 0.0
        %v1156 = vmax.f32 %v967, 0.0
        %v1157 = vmax.f32 %v971, 0.0
        %v1158 = vmax.f32 %v973, 0.0
        %v1159 = vmax.f32 %v975, 0.0
        %v1160 = vmax.f32 %v977, 0.0
        %v1161 = vmax.f32 %v981, 0.0
        %v1162 = vmax.f32 %v983, 0.0
        %v1163 = vmax.f32 %v985, 0.0
        %v1164 = vmax.f32 %v987, 0.0
        %v1165 = vmax.f32 %v991, 0.0
        %v1166 = vmax.f32 %v993, 0.0
        %v1167 = vmax.f32 %v995, 0.0
        %v1168 = vmax.f32 %v997, 0.0
        %v1169 = vmax.f32 %v1001, 0.0
        %v1170 = vmax.f32 %v1003, 0.0
        %v1171 = vmax.f32 %v1005, 0.0
        %v1172 = vmax.f32 %v1007, 0.0
        %v1173 = vmax.f32 %v1011, 0.0
        %v1174 = vmax.f32 %v1013, 0.0
        %v1175 = vmax.f32 %v1015, 0.0
        %v1176 = vmax.f32 %v1017, 0.0
        %v1177 = vmax.f32 %v1021, 0.0
        %v1178 = vmax.f32 %v1023, 0.0
        %v1179 = vmax.f32 %v1025, 0.0
        %v1180 = vmax.f32 %v1027, 0.0
        %v1181 = vmax.f32 %v1031, 0.0
        %v1182 = vmax.f32 %v1033, 0.0
        %v1183 = vmax.f32 %v1035, 0.0
        %v1184 = vmax.f32 %v1037, 0.0
        %v1185 = vmax.f32 %v1041, 0.0
        %v1186 = vmax.f32 %v1043, 0.0
        %v1187 = vmax.f32 %v1045, 0.0
        %v1188 = vmax.f32 %v1047, 0.0
        %v1189 = vmax.f32 %v1051, 0.0
        %v1190 = vmax.f32 %v1053, 0.0
        %v1191 = vmax.f32 %v1055, 0.0
        %v1192 = vmax.f32 %v1057, 0.0
        %v1193 = vmax.f32 %v1061, 0.0
        %v1194 = vmax.f32 %v1063, 0.0
        %v1195 = vmax.f32 %v1065, 0.0
        %v1196 = vmax.f32 %v1067, 0.0
        %v1197 = vpack.c.bf16 %v1071, %v1069
        %v1198 = vpack.c.bf16 %v1072, %v1070
        %v1199 = vpack.c.bf16 %v1075, %v1073
        %v1200 = vpack.c.bf16 %v1076, %v1074
        %v1201 = vpack.c.bf16 %v1079, %v1077
        %v1202 = vpack.c.bf16 %v1080, %v1078
        %v1203 = vpack.c.bf16 %v1083, %v1081
        %v1204 = vpack.c.bf16 %v1084, %v1082
        %v1205 = vpack.c.bf16 %v1087, %v1085
        %v1206 = vpack.c.bf16 %v1088, %v1086
        %v1207 = vpack.c.bf16 %v1091, %v1089
        %v1208 = vpack.c.bf16 %v1092, %v1090
        %v1209 = vpack.c.bf16 %v1095, %v1093
        %v1210 = vpack.c.bf16 %v1096, %v1094
        %v1211 = vpack.c.bf16 %v1099, %v1097
        %v1212 = vpack.c.bf16 %v1100, %v1098
        %v1213 = vpack.c.bf16 %v1103, %v1101
        %v1214 = vpack.c.bf16 %v1104, %v1102
        %v1215 = vpack.c.bf16 %v1107, %v1105
        %v1216 = vpack.c.bf16 %v1108, %v1106
        %v1217 = vpack.c.bf16 %v1111, %v1109
        %v1218 = vpack.c.bf16 %v1112, %v1110
        %v1219 = vpack.c.bf16 %v1115, %v1113
        %v1220 = vpack.c.bf16 %v1116, %v1114
        %v1221 = vpack.c.bf16 %v1119, %v1117
        %v1222 = vpack.c.bf16 %v1120, %v1118
        %v1223 = vpack.c.bf16 %v1123, %v1121
        %v1224 = vpack.c.bf16 %v1124, %v1122
        %v1225 = vpack.c.bf16 %v1127, %v1125
        %v1226 = vpack.c.bf16 %v1128, %v1126
        %v1227 = vpack.c.bf16 %v1131, %v1129
        %v1228 = vpack.c.bf16 %v1132, %v1130
        %v1229 = vpack.c.bf16 %v1135, %v1133
        %v1230 = vpack.c.bf16 %v1136, %v1134
        %v1231 = vpack.c.bf16 %v1139, %v1137
        %v1232 = vpack.c.bf16 %v1140, %v1138
        %v1233 = vpack.c.bf16 %v1143, %v1141
        %v1234 = vpack.c.bf16 %v1144, %v1142
        %v1235 = vpack.c.bf16 %v1147, %v1145
        %v1236 = vpack.c.bf16 %v1148, %v1146
        %v1237 = vpack.c.bf16 %v1151, %v1149
        %v1238 = vpack.c.bf16 %v1152, %v1150
        %v1239 = vpack.c.bf16 %v1155, %v1153
        %v1240 = vpack.c.bf16 %v1156, %v1154
        %v1241 = vpack.c.bf16 %v1159, %v1157
        %v1242 = vpack.c.bf16 %v1160, %v1158
        %v1243 = vpack.c.bf16 %v1163, %v1161
        %v1244 = vpack.c.bf16 %v1164, %v1162
        %v1245 = vpack.c.bf16 %v1167, %v1165
        %v1246 = vpack.c.bf16 %v1168, %v1166
        %v1247 = vpack.c.bf16 %v1171, %v1169
        %v1248 = vpack.c.bf16 %v1172, %v1170
        %v1249 = vpack.c.bf16 %v1175, %v1173
        %v1250 = vpack.c.bf16 %v1176, %v1174
        %v1251 = vpack.c.bf16 %v1179, %v1177
        %v1252 = vpack.c.bf16 %v1180, %v1178
        %v1253 = vpack.c.bf16 %v1183, %v1181
        %v1254 = vpack.c.bf16 %v1184, %v1182
        %v1255 = vpack.c.bf16 %v1187, %v1185
        %v1256 = vpack.c.bf16 %v1188, %v1186
        %v1257 = vpack.c.bf16 %v1191, %v1189
        %v1258 = vpack.c.bf16 %v1192, %v1190
        %v1259 = vpack.c.bf16 %v1195, %v1193
        %v1260 = vpack.c.bf16 %v1196, %v1194
        %v1261 = vld [vmem:[%s3] sm:$0xff]
        %v1262 = vld [vmem:[%s3 + $0x8] sm:$0xff]
        %v1263 = vld [vmem:[%s3 + $0x10] sm:$0xff]
        %v1264 = vld [vmem:[%s3 + $0x18] sm:$0xff]
        %v1265 = vld [vmem:[%s3 + $0x20] sm:$0xff]
        %v1266 = vld [vmem:[%s3 + $0x28] sm:$0xff]
        %v1267 = vld [vmem:[%s3 + $0x30] sm:$0xff]
        %v1268 = vld [vmem:[%s3 + $0x38] sm:$0xff]
        %v1269 = vld [vmem:[%s3 + $0x40] sm:$0xff]
        %v1270 = vld [vmem:[%s3 + $0x48] sm:$0xff]
        %v1271 = vld [vmem:[%s3 + $0x50] sm:$0xff]
        %v1272 = vld [vmem:[%s3 + $0x58] sm:$0xff]
        %v1273 = vld [vmem:[%s3 + $0x60] sm:$0xff]
        %v1274 = vld [vmem:[%s3 + $0x68] sm:$0xff]
        %v1275 = vld [vmem:[%s3 + $0x70] sm:$0xff]
        %v1276 = vld [vmem:[%s3 + $0x78] sm:$0xff]
        %v1277 = vld [vmem:[%s3 + $0x80] sm:$0xff]
        %v1278 = vld [vmem:[%s3 + $0x88] sm:$0xff]
        %v1279 = vld [vmem:[%s3 + $0x90] sm:$0xff]
        %v1280 = vld [vmem:[%s3 + $0x98] sm:$0xff]
        %v1281 = vld [vmem:[%s3 + $0xa0] sm:$0xff]
        %v1282 = vld [vmem:[%s3 + $0xa8] sm:$0xff]
        %v1283 = vld [vmem:[%s3 + $0xb0] sm:$0xff]
        %v1284 = vld [vmem:[%s3 + $0xb8] sm:$0xff]
        %v1285 = vld [vmem:[%s3 + $0xc0] sm:$0xff]
        %v1286 = vld [vmem:[%s3 + $0xc8] sm:$0xff]
        %v1287 = vld [vmem:[%s3 + $0xd0] sm:$0xff]
        %v1288 = vld [vmem:[%s3 + $0xd8] sm:$0xff]
        %v1289 = vld [vmem:[%s3 + $0xe0] sm:$0xff]
        %v1290 = vld [vmem:[%s3 + $0xe8] sm:$0xff]
        %v1291 = vld [vmem:[%s3 + $0xf0] sm:$0xff]
        %v1292 = vld [vmem:[%s3 + $0xf8] sm:$0xff]
        %v1293 = vld [vmem:[%s4] sm:$0x3]
        %v1295 = vlaneseq
        %v1296 = vshrl.u32 %v1295, 7
        %v1297 = vsub.s32 0, %v1296
        %v1298 = vrot.slane %v1293, %v1297
        %v1299 = vlaneseq
        %v1300 = vshrl.u32 %v1299, 7
        %v1301 = vsub.s32 1, %v1300
        %v1302 = vrot.slane %v1293, %v1301
        %v1337 = vunpack.c.l.b16 %v1261
        %v1338 = vunpack.c.h.b16 %v1261
        %v1339 = vunpack.c.l.b16 %v1262
        %v1340 = vunpack.c.h.b16 %v1262
        %v1341 = vunpack.c.l.b16 %v1263
        %v1342 = vunpack.c.h.b16 %v1263
        %v1343 = vunpack.c.l.b16 %v1264
        %v1344 = vunpack.c.h.b16 %v1264
        %v1345 = vunpack.c.l.b16 %v1265
        %v1346 = vunpack.c.h.b16 %v1265
        %v1347 = vunpack.c.l.b16 %v1266
        %v1348 = vunpack.c.h.b16 %v1266
        %v1349 = vunpack.c.l.b16 %v1267
        %v1350 = vunpack.c.h.b16 %v1267
        %v1351 = vunpack.c.l.b16 %v1268
        %v1352 = vunpack.c.h.b16 %v1268
        %v1353 = vunpack.c.l.b16 %v1269
        %v1354 = vunpack.c.h.b16 %v1269
        %v1355 = vunpack.c.l.b16 %v1270
        %v1356 = vunpack.c.h.b16 %v1270
        %v1357 = vunpack.c.l.b16 %v1271
        %v1358 = vunpack.c.h.b16 %v1271
        %v1359 = vunpack.c.l.b16 %v1272
        %v1360 = vunpack.c.h.b16 %v1272
        %v1361 = vunpack.c.l.b16 %v1273
        %v1362 = vunpack.c.h.b16 %v1273
        %v1363 = vunpack.c.l.b16 %v1274
        %v1364 = vunpack.c.h.b16 %v1274
        %v1365 = vunpack.c.l.b16 %v1275
        %v1366 = vunpack.c.h.b16 %v1275
        %v1367 = vunpack.c.l.b16 %v1276
        %v1368 = vunpack.c.h.b16 %v1276
        %v1369 = vunpack.c.l.b16 %v1277
        %v1370 = vunpack.c.h.b16 %v1277
        %v1371 = vunpack.c.l.b16 %v1278
        %v1372 = vunpack.c.h.b16 %v1278
        %v1373 = vunpack.c.l.b16 %v1279
        %v1374 = vunpack.c.h.b16 %v1279
        %v1375 = vunpack.c.l.b16 %v1280
        %v1376 = vunpack.c.h.b16 %v1280
        %v1377 = vunpack.c.l.b16 %v1281
        %v1378 = vunpack.c.h.b16 %v1281
        %v1379 = vunpack.c.l.b16 %v1282
        %v1380 = vunpack.c.h.b16 %v1282
        %v1381 = vunpack.c.l.b16 %v1283
        %v1382 = vunpack.c.h.b16 %v1283
        %v1383 = vunpack.c.l.b16 %v1284
        %v1384 = vunpack.c.h.b16 %v1284
        %v1385 = vunpack.c.l.b16 %v1285
        %v1386 = vunpack.c.h.b16 %v1285
        %v1387 = vunpack.c.l.b16 %v1286
        %v1388 = vunpack.c.h.b16 %v1286
        %v1389 = vunpack.c.l.b16 %v1287
        %v1390 = vunpack.c.h.b16 %v1287
        %v1391 = vunpack.c.l.b16 %v1288
        %v1392 = vunpack.c.h.b16 %v1288
        %v1393 = vunpack.c.l.b16 %v1289
        %v1394 = vunpack.c.h.b16 %v1289
        %v1395 = vunpack.c.l.b16 %v1290
        %v1396 = vunpack.c.h.b16 %v1290
        %v1397 = vunpack.c.l.b16 %v1291
        %v1398 = vunpack.c.h.b16 %v1291
        %v1399 = vunpack.c.l.b16 %v1292
        %v1400 = vunpack.c.h.b16 %v1292
        %v1401 = vpack.c.b16 %v1339, %v1337
        %v1402 = vpack.c.b16 %v1340, %v1338
        %v1403 = vpack.c.b16 %v1343, %v1341
        %v1404 = vpack.c.b16 %v1344, %v1342
        %v1405 = vpack.c.b16 %v1347, %v1345
        %v1406 = vpack.c.b16 %v1348, %v1346
        %v1407 = vpack.c.b16 %v1351, %v1349
        %v1408 = vpack.c.b16 %v1352, %v1350
        %v1409 = vpack.c.b16 %v1355, %v1353
        %v1410 = vpack.c.b16 %v1356, %v1354
        %v1411 = vpack.c.b16 %v1359, %v1357
        %v1412 = vpack.c.b16 %v1360, %v1358
        %v1413 = vpack.c.b16 %v1363, %v1361
        %v1414 = vpack.c.b16 %v1364, %v1362
        %v1415 = vpack.c.b16 %v1367, %v1365
        %v1416 = vpack.c.b16 %v1368, %v1366
        %v1417 = vpack.c.b16 %v1371, %v1369
        %v1418 = vpack.c.b16 %v1372, %v1370
        %v1419 = vpack.c.b16 %v1375, %v1373
        %v1420 = vpack.c.b16 %v1376, %v1374
        %v1421 = vpack.c.b16 %v1379, %v1377
        %v1422 = vpack.c.b16 %v1380, %v1378
        %v1423 = vpack.c.b16 %v1383, %v1381
        %v1424 = vpack.c.b16 %v1384, %v1382
        %v1425 = vpack.c.b16 %v1387, %v1385
        %v1426 = vpack.c.b16 %v1388, %v1386
        %v1427 = vpack.c.b16 %v1391, %v1389
        %v1428 = vpack.c.b16 %v1392, %v1390
        %v1429 = vpack.c.b16 %v1395, %v1393
        %v1430 = vpack.c.b16 %v1396, %v1394
        %v1431 = vpack.c.b16 %v1399, %v1397
        %v1432 = vpack.c.b16 %v1400, %v1398
        %1465 = vmatprep.subr.bf16.mxu0 %v1416
        %1466 = vmatpush1.bf16.msra.mxu0 %v1415
        %1467 = vmatprep.subr.bf16.mxu0 %v1414
        %1468 = vmatpush1.bf16.msra.mxu0 %v1413
        %1469 = vmatprep.subr.bf16.mxu0 %v1412
        %1470 = vmatpush1.bf16.msra.mxu0 %v1411
        %1471 = vmatprep.subr.bf16.mxu0 %v1410
        %1472 = vmatpush1.bf16.msra.mxu0 %v1409
        %1473 = vmatprep.subr.bf16.mxu0 %v1408
        %1474 = vmatpush1.bf16.msra.mxu0 %v1407
        %1475 = vmatprep.subr.bf16.mxu0 %v1406
        %1476 = vmatpush1.bf16.msra.mxu0 %v1405
        %1477 = vmatprep.subr.bf16.mxu0 %v1404
        %1478 = vmatpush1.bf16.msra.mxu0 %v1403
        %1479 = vmatprep.subr.bf16.mxu0 %v1402
        %1480 = vmatpush1.bf16.msra.mxu0 %v1401
        %1481 = vmatprep.subr.bf16.mxu0 %v1432
        %1482 = vmatpush2.bf16.msra.mxu0 %v1431
        %1483 = vmatprep.subr.bf16.mxu0 %v1430
        %1484 = vmatpush2.bf16.msra.mxu0 %v1429
        %1485 = vmatprep.subr.bf16.mxu0 %v1428
        %1486 = vmatpush2.bf16.msra.mxu0 %v1427
        %1487 = vmatprep.subr.bf16.mxu0 %v1426
        %1488 = vmatpush2.bf16.msra.mxu0 %v1425
        %1489 = vmatprep.subr.bf16.mxu0 %v1424
        %1490 = vmatpush2.bf16.msra.mxu0 %v1423
        %1491 = vmatprep.subr.bf16.mxu0 %v1422
        %1492 = vmatpush2.bf16.msra.mxu0 %v1421
        %1493 = vmatprep.subr.bf16.mxu0 %v1420
        %1494 = vmatpush2.bf16.msra.mxu0 %v1419
        %1495 = vmatprep.subr.bf16.mxu0 %v1418
        %1496 = vmatpush2.bf16.msra.mxu0 %v1417
        %1497 = vmatprep.mubr.bf16.mxu0 %v1198
        %1498 = vmatmul.mubr.bf16.gmra.mxu0 %v1197
        %v1499 = vpop.f32.mrf.mxu0
        %v1500 = vadd.f32 %v1298, %v1499
        %v1501 = vpop.f32.mrf.mxu0
        %v1502 = vadd.f32 %v1302, %v1501
        %v1503 = vpop.f32.mrf.mxu0
        %v1504 = vadd.f32 %v1298, %v1503
        %v1505 = vpop.f32.mrf.mxu0
        %v1506 = vadd.f32 %v1302, %v1505
        %1507 = vmatprep.mubr.bf16.mxu0 %v1200
        %1508 = vmatmul.mubr.bf16.gmra.mxu0 %v1199
        %v1509 = vpop.f32.mrf.mxu0
        %v1510 = vadd.f32 %v1298, %v1509
        %v1511 = vpop.f32.mrf.mxu0
        %v1512 = vadd.f32 %v1302, %v1511
        %v1513 = vpop.f32.mrf.mxu0
        %v1514 = vadd.f32 %v1298, %v1513
        %v1515 = vpop.f32.mrf.mxu0
        %v1516 = vadd.f32 %v1302, %v1515
        %1517 = vmatprep.mubr.bf16.mxu0 %v1202
        %1518 = vmatmul.mubr.bf16.gmra.mxu0 %v1201
        %v1519 = vpop.f32.mrf.mxu0
        %v1520 = vadd.f32 %v1298, %v1519
        %v1521 = vpop.f32.mrf.mxu0
        %v1522 = vadd.f32 %v1302, %v1521
        %v1523 = vpop.f32.mrf.mxu0
        %v1524 = vadd.f32 %v1298, %v1523
        %v1525 = vpop.f32.mrf.mxu0
        %v1526 = vadd.f32 %v1302, %v1525
        %1527 = vmatprep.mubr.bf16.mxu0 %v1204
        %1528 = vmatmul.mubr.bf16.gmra.mxu0 %v1203
        %v1529 = vpop.f32.mrf.mxu0
        %v1530 = vadd.f32 %v1298, %v1529
        %v1531 = vpop.f32.mrf.mxu0
        %v1532 = vadd.f32 %v1302, %v1531
        %v1533 = vpop.f32.mrf.mxu0
        %v1534 = vadd.f32 %v1298, %v1533
        %v1535 = vpop.f32.mrf.mxu0
        %v1536 = vadd.f32 %v1302, %v1535
        %1537 = vmatprep.mubr.bf16.mxu0 %v1206
        %1538 = vmatmul.mubr.bf16.gmra.mxu0 %v1205
        %v1539 = vpop.f32.mrf.mxu0
        %v1540 = vadd.f32 %v1298, %v1539
        %v1541 = vpop.f32.mrf.mxu0
        %v1542 = vadd.f32 %v1302, %v1541
        %v1543 = vpop.f32.mrf.mxu0
        %v1544 = vadd.f32 %v1298, %v1543
        %v1545 = vpop.f32.mrf.mxu0
        %v1546 = vadd.f32 %v1302, %v1545
        %1547 = vmatprep.mubr.bf16.mxu0 %v1208
        %1548 = vmatmul.mubr.bf16.gmra.mxu0 %v1207
        %v1549 = vpop.f32.mrf.mxu0
        %v1550 = vadd.f32 %v1298, %v1549
        %v1551 = vpop.f32.mrf.mxu0
        %v1552 = vadd.f32 %v1302, %v1551
        %v1553 = vpop.f32.mrf.mxu0
        %v1554 = vadd.f32 %v1298, %v1553
        %v1555 = vpop.f32.mrf.mxu0
        %v1556 = vadd.f32 %v1302, %v1555
        %1557 = vmatprep.mubr.bf16.mxu0 %v1210
        %1558 = vmatmul.mubr.bf16.gmra.mxu0 %v1209
        %v1559 = vpop.f32.mrf.mxu0
        %v1560 = vadd.f32 %v1298, %v1559
        %v1561 = vpop.f32.mrf.mxu0
        %v1562 = vadd.f32 %v1302, %v1561
        %v1563 = vpop.f32.mrf.mxu0
        %v1564 = vadd.f32 %v1298, %v1563
        %v1565 = vpop.f32.mrf.mxu0
        %v1566 = vadd.f32 %v1302, %v1565
        %1567 = vmatprep.mubr.bf16.mxu0 %v1212
        %1568 = vmatmul.mubr.bf16.gmra.mxu0 %v1211
        %v1569 = vpop.f32.mrf.mxu0
        %v1570 = vadd.f32 %v1298, %v1569
        %v1571 = vpop.f32.mrf.mxu0
        %v1572 = vadd.f32 %v1302, %v1571
        %v1573 = vpop.f32.mrf.mxu0
        %v1574 = vadd.f32 %v1298, %v1573
        %v1575 = vpop.f32.mrf.mxu0
        %v1576 = vadd.f32 %v1302, %v1575
        %1577 = vmatprep.mubr.bf16.mxu0 %v1214
        %1578 = vmatmul.mubr.bf16.gmra.mxu0 %v1213
        %v1579 = vpop.f32.mrf.mxu0
        %v1580 = vadd.f32 %v1298, %v1579
        %v1581 = vpop.f32.mrf.mxu0
        %v1582 = vadd.f32 %v1302, %v1581
        %v1583 = vpop.f32.mrf.mxu0
        %v1584 = vadd.f32 %v1298, %v1583
        %v1585 = vpop.f32.mrf.mxu0
        %v1586 = vadd.f32 %v1302, %v1585
        %1587 = vmatprep.mubr.bf16.mxu0 %v1216
        %1588 = vmatmul.mubr.bf16.gmra.mxu0 %v1215
        %v1589 = vpop.f32.mrf.mxu0
        %v1590 = vadd.f32 %v1298, %v1589
        %v1591 = vpop.f32.mrf.mxu0
        %v1592 = vadd.f32 %v1302, %v1591
        %v1593 = vpop.f32.mrf.mxu0
        %v1594 = vadd.f32 %v1298, %v1593
        %v1595 = vpop.f32.mrf.mxu0
        %v1596 = vadd.f32 %v1302, %v1595
        %1597 = vmatprep.mubr.bf16.mxu0 %v1218
        %1598 = vmatmul.mubr.bf16.gmra.mxu0 %v1217
        %v1599 = vpop.f32.mrf.mxu0
        %v1600 = vadd.f32 %v1298, %v1599
        %v1601 = vpop.f32.mrf.mxu0
        %v1602 = vadd.f32 %v1302, %v1601
        %v1603 = vpop.f32.mrf.mxu0
        %v1604 = vadd.f32 %v1298, %v1603
        %v1605 = vpop.f32.mrf.mxu0
        %v1606 = vadd.f32 %v1302, %v1605
        %1607 = vmatprep.mubr.bf16.mxu0 %v1220
        %1608 = vmatmul.mubr.bf16.gmra.mxu0 %v1219
        %v1609 = vpop.f32.mrf.mxu0
        %v1610 = vadd.f32 %v1298, %v1609
        %v1611 = vpop.f32.mrf.mxu0
        %v1612 = vadd.f32 %v1302, %v1611
        %v1613 = vpop.f32.mrf.mxu0
        %v1614 = vadd.f32 %v1298, %v1613
        %v1615 = vpop.f32.mrf.mxu0
        %v1616 = vadd.f32 %v1302, %v1615
        %1617 = vmatprep.mubr.bf16.mxu0 %v1222
        %1618 = vmatmul.mubr.bf16.gmra.mxu0 %v1221
        %v1619 = vpop.f32.mrf.mxu0
        %v1620 = vadd.f32 %v1298, %v1619
        %v1621 = vpop.f32.mrf.mxu0
        %v1622 = vadd.f32 %v1302, %v1621
        %v1623 = vpop.f32.mrf.mxu0
        %v1624 = vadd.f32 %v1298, %v1623
        %v1625 = vpop.f32.mrf.mxu0
        %v1626 = vadd.f32 %v1302, %v1625
        %1627 = vmatprep.mubr.bf16.mxu0 %v1224
        %1628 = vmatmul.mubr.bf16.gmra.mxu0 %v1223
        %v1629 = vpop.f32.mrf.mxu0
        %v1630 = vadd.f32 %v1298, %v1629
        %v1631 = vpop.f32.mrf.mxu0
        %v1632 = vadd.f32 %v1302, %v1631
        %v1633 = vpop.f32.mrf.mxu0
        %v1634 = vadd.f32 %v1298, %v1633
        %v1635 = vpop.f32.mrf.mxu0
        %v1636 = vadd.f32 %v1302, %v1635
        %1637 = vmatprep.mubr.bf16.mxu0 %v1226
        %1638 = vmatmul.mubr.bf16.gmra.mxu0 %v1225
        %v1639 = vpop.f32.mrf.mxu0
        %v1640 = vadd.f32 %v1298, %v1639
        %v1641 = vpop.f32.mrf.mxu0
        %v1642 = vadd.f32 %v1302, %v1641
        %v1643 = vpop.f32.mrf.mxu0
        %v1644 = vadd.f32 %v1298, %v1643
        %v1645 = vpop.f32.mrf.mxu0
        %v1646 = vadd.f32 %v1302, %v1645
        %1647 = vmatprep.mubr.bf16.mxu0 %v1228
        %1648 = vmatmul.mubr.bf16.gmra.mxu0 %v1227
        %v1649 = vpop.f32.mrf.mxu0
        %v1650 = vadd.f32 %v1298, %v1649
        %v1651 = vpop.f32.mrf.mxu0
        %v1652 = vadd.f32 %v1302, %v1651
        %v1653 = vpop.f32.mrf.mxu0
        %v1654 = vadd.f32 %v1298, %v1653
        %v1655 = vpop.f32.mrf.mxu0
        %v1656 = vadd.f32 %v1302, %v1655
        %1657 = vmatprep.mubr.bf16.mxu0 %v1230
        %1658 = vmatmul.mubr.bf16.gmra.mxu0 %v1229
        %v1659 = vpop.f32.mrf.mxu0
        %v1660 = vadd.f32 %v1298, %v1659
        %v1661 = vpop.f32.mrf.mxu0
        %v1662 = vadd.f32 %v1302, %v1661
        %v1663 = vpop.f32.mrf.mxu0
        %v1664 = vadd.f32 %v1298, %v1663
        %v1665 = vpop.f32.mrf.mxu0
        %v1666 = vadd.f32 %v1302, %v1665
        %1667 = vmatprep.mubr.bf16.mxu0 %v1232
        %1668 = vmatmul.mubr.bf16.gmra.mxu0 %v1231
        %v1669 = vpop.f32.mrf.mxu0
        %v1670 = vadd.f32 %v1298, %v1669
        %v1671 = vpop.f32.mrf.mxu0
        %v1672 = vadd.f32 %v1302, %v1671
        %v1673 = vpop.f32.mrf.mxu0
        %v1674 = vadd.f32 %v1298, %v1673
        %v1675 = vpop.f32.mrf.mxu0
        %v1676 = vadd.f32 %v1302, %v1675
        %1677 = vmatprep.mubr.bf16.mxu0 %v1234
        %1678 = vmatmul.mubr.bf16.gmra.mxu0 %v1233
        %v1679 = vpop.f32.mrf.mxu0
        %v1680 = vadd.f32 %v1298, %v1679
        %v1681 = vpop.f32.mrf.mxu0
        %v1682 = vadd.f32 %v1302, %v1681
        %v1683 = vpop.f32.mrf.mxu0
        %v1684 = vadd.f32 %v1298, %v1683
        %v1685 = vpop.f32.mrf.mxu0
        %v1686 = vadd.f32 %v1302, %v1685
        %1687 = vmatprep.mubr.bf16.mxu0 %v1236
        %1688 = vmatmul.mubr.bf16.gmra.mxu0 %v1235
        %v1689 = vpop.f32.mrf.mxu0
        %v1690 = vadd.f32 %v1298, %v1689
        %v1691 = vpop.f32.mrf.mxu0
        %v1692 = vadd.f32 %v1302, %v1691
        %v1693 = vpop.f32.mrf.mxu0
        %v1694 = vadd.f32 %v1298, %v1693
        %v1695 = vpop.f32.mrf.mxu0
        %v1696 = vadd.f32 %v1302, %v1695
        %1697 = vmatprep.mubr.bf16.mxu0 %v1238
        %1698 = vmatmul.mubr.bf16.gmra.mxu0 %v1237
        %v1699 = vpop.f32.mrf.mxu0
        %v1700 = vadd.f32 %v1298, %v1699
        %v1701 = vpop.f32.mrf.mxu0
        %v1702 = vadd.f32 %v1302, %v1701
        %v1703 = vpop.f32.mrf.mxu0
        %v1704 = vadd.f32 %v1298, %v1703
        %v1705 = vpop.f32.mrf.mxu0
        %v1706 = vadd.f32 %v1302, %v1705
        %1707 = vmatprep.mubr.bf16.mxu0 %v1240
        %1708 = vmatmul.mubr.bf16.gmra.mxu0 %v1239
        %v1709 = vpop.f32.mrf.mxu0
        %v1710 = vadd.f32 %v1298, %v1709
        %v1711 = vpop.f32.mrf.mxu0
        %v1712 = vadd.f32 %v1302, %v1711
        %v1713 = vpop.f32.mrf.mxu0
        %v1714 = vadd.f32 %v1298, %v1713
        %v1715 = vpop.f32.mrf.mxu0
        %v1716 = vadd.f32 %v1302, %v1715
        %1717 = vmatprep.mubr.bf16.mxu0 %v1242
        %1718 = vmatmul.mubr.bf16.gmra.mxu0 %v1241
        %v1719 = vpop.f32.mrf.mxu0
        %v1720 = vadd.f32 %v1298, %v1719
        %v1721 = vpop.f32.mrf.mxu0
        %v1722 = vadd.f32 %v1302, %v1721
        %v1723 = vpop.f32.mrf.mxu0
        %v1724 = vadd.f32 %v1298, %v1723
        %v1725 = vpop.f32.mrf.mxu0
        %v1726 = vadd.f32 %v1302, %v1725
        %1727 = vmatprep.mubr.bf16.mxu0 %v1244
        %1728 = vmatmul.mubr.bf16.gmra.mxu0 %v1243
        %v1729 = vpop.f32.mrf.mxu0
        %v1730 = vadd.f32 %v1298, %v1729
        %v1731 = vpop.f32.mrf.mxu0
        %v1732 = vadd.f32 %v1302, %v1731
        %v1733 = vpop.f32.mrf.mxu0
        %v1734 = vadd.f32 %v1298, %v1733
        %v1735 = vpop.f32.mrf.mxu0
        %v1736 = vadd.f32 %v1302, %v1735
        %1737 = vmatprep.mubr.bf16.mxu0 %v1246
        %1738 = vmatmul.mubr.bf16.gmra.mxu0 %v1245
        %v1739 = vpop.f32.mrf.mxu0
        %v1740 = vadd.f32 %v1298, %v1739
        %v1741 = vpop.f32.mrf.mxu0
        %v1742 = vadd.f32 %v1302, %v1741
        %v1743 = vpop.f32.mrf.mxu0
        %v1744 = vadd.f32 %v1298, %v1743
        %v1745 = vpop.f32.mrf.mxu0
        %v1746 = vadd.f32 %v1302, %v1745
        %1747 = vmatprep.mubr.bf16.mxu0 %v1248
        %1748 = vmatmul.mubr.bf16.gmra.mxu0 %v1247
        %v1749 = vpop.f32.mrf.mxu0
        %v1750 = vadd.f32 %v1298, %v1749
        %v1751 = vpop.f32.mrf.mxu0
        %v1752 = vadd.f32 %v1302, %v1751
        %v1753 = vpop.f32.mrf.mxu0
        %v1754 = vadd.f32 %v1298, %v1753
        %v1755 = vpop.f32.mrf.mxu0
        %v1756 = vadd.f32 %v1302, %v1755
        %1757 = vmatprep.mubr.bf16.mxu0 %v1250
        %1758 = vmatmul.mubr.bf16.gmra.mxu0 %v1249
        %v1759 = vpop.f32.mrf.mxu0
        %v1760 = vadd.f32 %v1298, %v1759
        %v1761 = vpop.f32.mrf.mxu0
        %v1762 = vadd.f32 %v1302, %v1761
        %v1763 = vpop.f32.mrf.mxu0
        %v1764 = vadd.f32 %v1298, %v1763
        %v1765 = vpop.f32.mrf.mxu0
        %v1766 = vadd.f32 %v1302, %v1765
        %1767 = vmatprep.mubr.bf16.mxu0 %v1252
        %1768 = vmatmul.mubr.bf16.gmra.mxu0 %v1251
        %v1769 = vpop.f32.mrf.mxu0
        %v1770 = vadd.f32 %v1298, %v1769
        %v1771 = vpop.f32.mrf.mxu0
        %v1772 = vadd.f32 %v1302, %v1771
        %v1773 = vpop.f32.mrf.mxu0
        %v1774 = vadd.f32 %v1298, %v1773
        %v1775 = vpop.f32.mrf.mxu0
        %v1776 = vadd.f32 %v1302, %v1775
        %1777 = vmatprep.mubr.bf16.mxu0 %v1254
        %1778 = vmatmul.mubr.bf16.gmra.mxu0 %v1253
        %v1779 = vpop.f32.mrf.mxu0
        %v1780 = vadd.f32 %v1298, %v1779
        %v1781 = vpop.f32.mrf.mxu0
        %v1782 = vadd.f32 %v1302, %v1781
        %v1783 = vpop.f32.mrf.mxu0
        %v1784 = vadd.f32 %v1298, %v1783
        %v1785 = vpop.f32.mrf.mxu0
        %v1786 = vadd.f32 %v1302, %v1785
        %1787 = vmatprep.mubr.bf16.mxu0 %v1256
        %1788 = vmatmul.mubr.bf16.gmra.mxu0 %v1255
        %v1789 = vpop.f32.mrf.mxu0
        %v1790 = vadd.f32 %v1298, %v1789
        %v1791 = vpop.f32.mrf.mxu0
        %v1792 = vadd.f32 %v1302, %v1791
        %v1793 = vpop.f32.mrf.mxu0
        %v1794 = vadd.f32 %v1298, %v1793
        %v1795 = vpop.f32.mrf.mxu0
        %v1796 = vadd.f32 %v1302, %v1795
        %1797 = vmatprep.mubr.bf16.mxu0 %v1258
        %1798 = vmatmul.mubr.bf16.gmra.mxu0 %v1257
        %v1799 = vpop.f32.mrf.mxu0
        %v1800 = vadd.f32 %v1298, %v1799
        %v1801 = vpop.f32.mrf.mxu0
        %v1802 = vadd.f32 %v1302, %v1801
        %v1803 = vpop.f32.mrf.mxu0
        %v1804 = vadd.f32 %v1298, %v1803
        %v1805 = vpop.f32.mrf.mxu0
        %v1806 = vadd.f32 %v1302, %v1805
        %1807 = vmatprep.mubr.bf16.mxu0 %v1260
        %1808 = vmatmul.mubr.bf16.gmra.mxu0 %v1259
        %v1809 = vpop.f32.mrf.mxu0
        %v1810 = vadd.f32 %v1298, %v1809
        %v1811 = vpop.f32.mrf.mxu0
        %v1812 = vadd.f32 %v1302, %v1811
        %v1813 = vpop.f32.mrf.mxu0
        %v1814 = vadd.f32 %v1298, %v1813
        %v1815 = vpop.f32.mrf.mxu0
        %v1816 = vadd.f32 %v1302, %v1815
        %1817 = vdwg.mxu0
        %v1818 = vmax.f32 %v1500, 0.0
        %v1819 = vmax.f32 %v1502, 0.0
        %v1820 = vmax.f32 %v1504, 0.0
        %v1821 = vmax.f32 %v1506, 0.0
        %v1822 = vmax.f32 %v1510, 0.0
        %v1823 = vmax.f32 %v1512, 0.0
        %v1824 = vmax.f32 %v1514, 0.0
        %v1825 = vmax.f32 %v1516, 0.0
        %v1826 = vmax.f32 %v1520, 0.0
        %v1827 = vmax.f32 %v1522, 0.0
        %v1828 = vmax.f32 %v1524, 0.0
        %v1829 = vmax.f32 %v1526, 0.0
        %v1830 = vmax.f32 %v1530, 0.0
        %v1831 = vmax.f32 %v1532, 0.0
        %v1832 = vmax.f32 %v1534, 0.0
        %v1833 = vmax.f32 %v1536, 0.0
        %v1834 = vmax.f32 %v1540, 0.0
        %v1835 = vmax.f32 %v1542, 0.0
        %v1836 = vmax.f32 %v1544, 0.0
        %v1837 = vmax.f32 %v1546, 0.0
        %v1838 = vmax.f32 %v1550, 0.0
        %v1839 = vmax.f32 %v1552, 0.0
        %v1840 = vmax.f32 %v1554, 0.0
        %v1841 = vmax.f32 %v1556, 0.0
        %v1842 = vmax.f32 %v1560, 0.0
        %v1843 = vmax.f32 %v1562, 0.0
        %v1844 = vmax.f32 %v1564, 0.0
        %v1845 = vmax.f32 %v1566, 0.0
        %v1846 = vmax.f32 %v1570, 0.0
        %v1847 = vmax.f32 %v1572, 0.0
        %v1848 = vmax.f32 %v1574, 0.0
        %v1849 = vmax.f32 %v1576, 0.0
        %v1850 = vmax.f32 %v1580, 0.0
        %v1851 = vmax.f32 %v1582, 0.0
        %v1852 = vmax.f32 %v1584, 0.0
        %v1853 = vmax.f32 %v1586, 0.0
        %v1854 = vmax.f32 %v1590, 0.0
        %v1855 = vmax.f32 %v1592, 0.0
        %v1856 = vmax.f32 %v1594, 0.0
        %v1857 = vmax.f32 %v1596, 0.0
        %v1858 = vmax.f32 %v1600, 0.0
        %v1859 = vmax.f32 %v1602, 0.0
        %v1860 = vmax.f32 %v1604, 0.0
        %v1861 = vmax.f32 %v1606, 0.0
        %v1862 = vmax.f32 %v1610, 0.0
        %v1863 = vmax.f32 %v1612, 0.0
        %v1864 = vmax.f32 %v1614, 0.0
        %v1865 = vmax.f32 %v1616, 0.0
        %v1866 = vmax.f32 %v1620, 0.0
        %v1867 = vmax.f32 %v1622, 0.0
        %v1868 = vmax.f32 %v1624, 0.0
        %v1869 = vmax.f32 %v1626, 0.0
        %v1870 = vmax.f32 %v1630, 0.0
        %v1871 = vmax.f32 %v1632, 0.0
        %v1872 = vmax.f32 %v1634, 0.0
        %v1873 = vmax.f32 %v1636, 0.0
        %v1874 = vmax.f32 %v1640, 0.0
        %v1875 = vmax.f32 %v1642, 0.0
        %v1876 = vmax.f32 %v1644, 0.0
        %v1877 = vmax.f32 %v1646, 0.0
        %v1878 = vmax.f32 %v1650, 0.0
        %v1879 = vmax.f32 %v1652, 0.0
        %v1880 = vmax.f32 %v1654, 0.0
        %v1881 = vmax.f32 %v1656, 0.0
        %v1882 = vmax.f32 %v1660, 0.0
        %v1883 = vmax.f32 %v1662, 0.0
        %v1884 = vmax.f32 %v1664, 0.0
        %v1885 = vmax.f32 %v1666, 0.0
        %v1886 = vmax.f32 %v1670, 0.0
        %v1887 = vmax.f32 %v1672, 0.0
        %v1888 = vmax.f32 %v1674, 0.0
        %v1889 = vmax.f32 %v1676, 0.0
        %v1890 = vmax.f32 %v1680, 0.0
        %v1891 = vmax.f32 %v1682, 0.0
        %v1892 = vmax.f32 %v1684, 0.0
        %v1893 = vmax.f32 %v1686, 0.0
        %v1894 = vmax.f32 %v1690, 0.0
        %v1895 = vmax.f32 %v1692, 0.0
        %v1896 = vmax.f32 %v1694, 0.0
        %v1897 = vmax.f32 %v1696, 0.0
        %v1898 = vmax.f32 %v1700, 0.0
        %v1899 = vmax.f32 %v1702, 0.0
        %v1900 = vmax.f32 %v1704, 0.0
        %v1901 = vmax.f32 %v1706, 0.0
        %v1902 = vmax.f32 %v1710, 0.0
        %v1903 = vmax.f32 %v1712, 0.0
        %v1904 = vmax.f32 %v1714, 0.0
        %v1905 = vmax.f32 %v1716, 0.0
        %v1906 = vmax.f32 %v1720, 0.0
        %v1907 = vmax.f32 %v1722, 0.0
        %v1908 = vmax.f32 %v1724, 0.0
        %v1909 = vmax.f32 %v1726, 0.0
        %v1910 = vmax.f32 %v1730, 0.0
        %v1911 = vmax.f32 %v1732, 0.0
        %v1912 = vmax.f32 %v1734, 0.0
        %v1913 = vmax.f32 %v1736, 0.0
        %v1914 = vmax.f32 %v1740, 0.0
        %v1915 = vmax.f32 %v1742, 0.0
        %v1916 = vmax.f32 %v1744, 0.0
        %v1917 = vmax.f32 %v1746, 0.0
        %v1918 = vmax.f32 %v1750, 0.0
        %v1919 = vmax.f32 %v1752, 0.0
        %v1920 = vmax.f32 %v1754, 0.0
        %v1921 = vmax.f32 %v1756, 0.0
        %v1922 = vmax.f32 %v1760, 0.0
        %v1923 = vmax.f32 %v1762, 0.0
        %v1924 = vmax.f32 %v1764, 0.0
        %v1925 = vmax.f32 %v1766, 0.0
        %v1926 = vmax.f32 %v1770, 0.0
        %v1927 = vmax.f32 %v1772, 0.0
        %v1928 = vmax.f32 %v1774, 0.0
        %v1929 = vmax.f32 %v1776, 0.0
        %v1930 = vmax.f32 %v1780, 0.0
        %v1931 = vmax.f32 %v1782, 0.0
        %v1932 = vmax.f32 %v1784, 0.0
        %v1933 = vmax.f32 %v1786, 0.0
        %v1934 = vmax.f32 %v1790, 0.0
        %v1935 = vmax.f32 %v1792, 0.0
        %v1936 = vmax.f32 %v1794, 0.0
        %v1937 = vmax.f32 %v1796, 0.0
        %v1938 = vmax.f32 %v1800, 0.0
        %v1939 = vmax.f32 %v1802, 0.0
        %v1940 = vmax.f32 %v1804, 0.0
        %v1941 = vmax.f32 %v1806, 0.0
        %v1942 = vmax.f32 %v1810, 0.0
        %v1943 = vmax.f32 %v1812, 0.0
        %v1944 = vmax.f32 %v1814, 0.0
        %v1945 = vmax.f32 %v1816, 0.0
        %v1946 = vpack.c.bf16 %v1820, %v1818
        %v1947 = vpack.c.bf16 %v1821, %v1819
        %v1948 = vpack.c.bf16 %v1824, %v1822
        %v1949 = vpack.c.bf16 %v1825, %v1823
        %v1950 = vpack.c.bf16 %v1828, %v1826
        %v1951 = vpack.c.bf16 %v1829, %v1827
        %v1952 = vpack.c.bf16 %v1832, %v1830
        %v1953 = vpack.c.bf16 %v1833, %v1831
        %v1954 = vpack.c.bf16 %v1836, %v1834
        %v1955 = vpack.c.bf16 %v1837, %v1835
        %v1956 = vpack.c.bf16 %v1840, %v1838
        %v1957 = vpack.c.bf16 %v1841, %v1839
        %v1958 = vpack.c.bf16 %v1844, %v1842
        %v1959 = vpack.c.bf16 %v1845, %v1843
        %v1960 = vpack.c.bf16 %v1848, %v1846
        %v1961 = vpack.c.bf16 %v1849, %v1847
        %v1962 = vpack.c.bf16 %v1852, %v1850
        %v1963 = vpack.c.bf16 %v1853, %v1851
        %v1964 = vpack.c.bf16 %v1856, %v1854
        %v1965 = vpack.c.bf16 %v1857, %v1855
        %v1966 = vpack.c.bf16 %v1860, %v1858
        %v1967 = vpack.c.bf16 %v1861, %v1859
        %v1968 = vpack.c.bf16 %v1864, %v1862
        %v1969 = vpack.c.bf16 %v1865, %v1863
        %v1970 = vpack.c.bf16 %v1868, %v1866
        %v1971 = vpack.c.bf16 %v1869, %v1867
        %v1972 = vpack.c.bf16 %v1872, %v1870
        %v1973 = vpack.c.bf16 %v1873, %v1871
        %v1974 = vpack.c.bf16 %v1876, %v1874
        %v1975 = vpack.c.bf16 %v1877, %v1875
        %v1976 = vpack.c.bf16 %v1880, %v1878
        %v1977 = vpack.c.bf16 %v1881, %v1879
        %v1978 = vpack.c.bf16 %v1884, %v1882
        %v1979 = vpack.c.bf16 %v1885, %v1883
        %v1980 = vpack.c.bf16 %v1888, %v1886
        %v1981 = vpack.c.bf16 %v1889, %v1887
        %v1982 = vpack.c.bf16 %v1892, %v1890
        %v1983 = vpack.c.bf16 %v1893, %v1891
        %v1984 = vpack.c.bf16 %v1896, %v1894
        %v1985 = vpack.c.bf16 %v1897, %v1895
        %v1986 = vpack.c.bf16 %v1900, %v1898
        %v1987 = vpack.c.bf16 %v1901, %v1899
        %v1988 = vpack.c.bf16 %v1904, %v1902
        %v1989 = vpack.c.bf16 %v1905, %v1903
        %v1990 = vpack.c.bf16 %v1908, %v1906
        %v1991 = vpack.c.bf16 %v1909, %v1907
        %v1992 = vpack.c.bf16 %v1912, %v1910
        %v1993 = vpack.c.bf16 %v1913, %v1911
        %v1994 = vpack.c.bf16 %v1916, %v1914
        %v1995 = vpack.c.bf16 %v1917, %v1915
        %v1996 = vpack.c.bf16 %v1920, %v1918
        %v1997 = vpack.c.bf16 %v1921, %v1919
        %v1998 = vpack.c.bf16 %v1924, %v1922
        %v1999 = vpack.c.bf16 %v1925, %v1923
        %v2000 = vpack.c.bf16 %v1928, %v1926
        %v2001 = vpack.c.bf16 %v1929, %v1927
        %v2002 = vpack.c.bf16 %v1932, %v1930
        %v2003 = vpack.c.bf16 %v1933, %v1931
        %v2004 = vpack.c.bf16 %v1936, %v1934
        %v2005 = vpack.c.bf16 %v1937, %v1935
        %v2006 = vpack.c.bf16 %v1940, %v1938
        %v2007 = vpack.c.bf16 %v1941, %v1939
        %v2008 = vpack.c.bf16 %v1944, %v1942
        %v2009 = vpack.c.bf16 %v1945, %v1943
        %v2010 = vld [vmem:[%s5] sm:$0xf]
        %v2011 = vld [vmem:[%s5 + $0x4] sm:$0xf]
        %v2012 = vld [vmem:[%s5 + $0x8] sm:$0xf]
        %v2013 = vld [vmem:[%s5 + $0xc] sm:$0xf]
        %v2014 = vld [vmem:[%s5 + $0x10] sm:$0xf]
        %v2015 = vld [vmem:[%s5 + $0x14] sm:$0xf]
        %v2016 = vld [vmem:[%s5 + $0x18] sm:$0xf]
        %v2017 = vld [vmem:[%s5 + $0x1c] sm:$0xf]
        %v2018 = vld [vmem:[%s5 + $0x20] sm:$0xf]
        %v2019 = vld [vmem:[%s5 + $0x24] sm:$0xf]
        %v2020 = vld [vmem:[%s5 + $0x28] sm:$0xf]
        %v2021 = vld [vmem:[%s5 + $0x2c] sm:$0xf]
        %v2022 = vld [vmem:[%s5 + $0x30] sm:$0xf]
        %v2023 = vld [vmem:[%s5 + $0x34] sm:$0xf]
        %v2024 = vld [vmem:[%s5 + $0x38] sm:$0xf]
        %v2025 = vld [vmem:[%s5 + $0x3c] sm:$0xf]
        %v2026 = vld [vmem:[%s5 + $0x40] sm:$0xf]
        %v2027 = vld [vmem:[%s5 + $0x44] sm:$0xf]
        %v2028 = vld [vmem:[%s5 + $0x48] sm:$0xf]
        %v2029 = vld [vmem:[%s5 + $0x4c] sm:$0xf]
        %v2030 = vld [vmem:[%s5 + $0x50] sm:$0xf]
        %v2031 = vld [vmem:[%s5 + $0x54] sm:$0xf]
        %v2032 = vld [vmem:[%s5 + $0x58] sm:$0xf]
        %v2033 = vld [vmem:[%s5 + $0x5c] sm:$0xf]
        %v2034 = vld [vmem:[%s5 + $0x60] sm:$0xf]
        %v2035 = vld [vmem:[%s5 + $0x64] sm:$0xf]
        %v2036 = vld [vmem:[%s5 + $0x68] sm:$0xf]
        %v2037 = vld [vmem:[%s5 + $0x6c] sm:$0xf]
        %v2038 = vld [vmem:[%s5 + $0x70] sm:$0xf]
        %v2039 = vld [vmem:[%s5 + $0x74] sm:$0xf]
        %v2040 = vld [vmem:[%s5 + $0x78] sm:$0xf]
        %v2041 = vld [vmem:[%s5 + $0x7c] sm:$0xf]
        %v2042 = vld [vmem:[%s6] sm:$0x1]
        %v2044 = vlaneseq
        %v2045 = vshrl.u32 %v2044, 7
        %v2046 = vsub.s32 0, %v2045
        %v2047 = vrot.slane %v2042, %v2046
        %v2081 = vunpack.c.l.b16 %v2010
        %v2082 = vunpack.c.l.b16 %v2011
        %v2083 = vunpack.c.l.b16 %v2012
        %v2084 = vunpack.c.l.b16 %v2013
        %v2085 = vunpack.c.l.b16 %v2014
        %v2086 = vunpack.c.l.b16 %v2015
        %v2087 = vunpack.c.l.b16 %v2016
        %v2088 = vunpack.c.l.b16 %v2017
        %v2089 = vunpack.c.l.b16 %v2018
        %v2090 = vunpack.c.l.b16 %v2019
        %v2091 = vunpack.c.l.b16 %v2020
        %v2092 = vunpack.c.l.b16 %v2021
        %v2093 = vunpack.c.l.b16 %v2022
        %v2094 = vunpack.c.l.b16 %v2023
        %v2095 = vunpack.c.l.b16 %v2024
        %v2096 = vunpack.c.l.b16 %v2025
        %v2097 = vunpack.c.l.b16 %v2026
        %v2098 = vunpack.c.l.b16 %v2027
        %v2099 = vunpack.c.l.b16 %v2028
        %v2100 = vunpack.c.l.b16 %v2029
        %v2101 = vunpack.c.l.b16 %v2030
        %v2102 = vunpack.c.l.b16 %v2031
        %v2103 = vunpack.c.l.b16 %v2032
        %v2104 = vunpack.c.l.b16 %v2033
        %v2105 = vunpack.c.l.b16 %v2034
        %v2106 = vunpack.c.l.b16 %v2035
        %v2107 = vunpack.c.l.b16 %v2036
        %v2108 = vunpack.c.l.b16 %v2037
        %v2109 = vunpack.c.l.b16 %v2038
        %v2110 = vunpack.c.l.b16 %v2039
        %v2111 = vunpack.c.l.b16 %v2040
        %v2112 = vunpack.c.l.b16 %v2041
        %v2113 = vpack.c.b16 %v2082, %v2081
        %v2114 = vpack.c.b16 %v2084, %v2083
        %v2115 = vpack.c.b16 %v2086, %v2085
        %v2116 = vpack.c.b16 %v2088, %v2087
        %v2117 = vpack.c.b16 %v2090, %v2089
        %v2118 = vpack.c.b16 %v2092, %v2091
        %v2119 = vpack.c.b16 %v2094, %v2093
        %v2120 = vpack.c.b16 %v2096, %v2095
        %v2121 = vpack.c.b16 %v2098, %v2097
        %v2122 = vpack.c.b16 %v2100, %v2099
        %v2123 = vpack.c.b16 %v2102, %v2101
        %v2124 = vpack.c.b16 %v2104, %v2103
        %v2125 = vpack.c.b16 %v2106, %v2105
        %v2126 = vpack.c.b16 %v2108, %v2107
        %v2127 = vpack.c.b16 %v2110, %v2109
        %v2128 = vpack.c.b16 %v2112, %v2111
        %2145 = vmatprep.subr.bf16.mxu0 0
        %2146 = vmatpush1.bf16.msra.mxu0 %v2120
        %2147 = vmatprep.subr.bf16.mxu0 0
        %2148 = vmatpush1.bf16.msra.mxu0 %v2119
        %2149 = vmatprep.subr.bf16.mxu0 0
        %2150 = vmatpush1.bf16.msra.mxu0 %v2118
        %2151 = vmatprep.subr.bf16.mxu0 0
        %2152 = vmatpush1.bf16.msra.mxu0 %v2117
        %2153 = vmatprep.subr.bf16.mxu0 0
        %2154 = vmatpush1.bf16.msra.mxu0 %v2116
        %2155 = vmatprep.subr.bf16.mxu0 0
        %2156 = vmatpush1.bf16.msra.mxu0 %v2115
        %2157 = vmatprep.subr.bf16.mxu0 0
        %2158 = vmatpush1.bf16.msra.mxu0 %v2114
        %2159 = vmatprep.subr.bf16.mxu0 0
        %2160 = vmatpush1.bf16.msra.mxu0 %v2113
        %2161 = vmatprep.subr.bf16.mxu0 0
        %2162 = vmatpush2.bf16.msra.mxu0 %v2128
        %2163 = vmatprep.subr.bf16.mxu0 0
        %2164 = vmatpush2.bf16.msra.mxu0 %v2127
        %2165 = vmatprep.subr.bf16.mxu0 0
        %2166 = vmatpush2.bf16.msra.mxu0 %v2126
        %2167 = vmatprep.subr.bf16.mxu0 0
        %2168 = vmatpush2.bf16.msra.mxu0 %v2125
        %2169 = vmatprep.subr.bf16.mxu0 0
        %2170 = vmatpush2.bf16.msra.mxu0 %v2124
        %2171 = vmatprep.subr.bf16.mxu0 0
        %2172 = vmatpush2.bf16.msra.mxu0 %v2123
        %2173 = vmatprep.subr.bf16.mxu0 0
        %2174 = vmatpush2.bf16.msra.mxu0 %v2122
        %2175 = vmatprep.subr.bf16.mxu0 0
        %2176 = vmatpush2.bf16.msra.mxu0 %v2121
        %2177 = vmatprep.mubr.bf16.mxu0 %v1947
        %2178 = vmatmul.mubr.bf16.gmra.mxu0 %v1946
        %v2179 = vpop.f32.mrf.mxu0
        %v2180 = vadd.f32 %v2047, %v2179
        %v2181 = vpop.f32.mrf.mxu0
        %v2182 = vpop.f32.mrf.mxu0
        %v2183 = vadd.f32 %v2047, %v2182
        %v2184 = vpop.f32.mrf.mxu0
        %2185 = vmatprep.mubr.bf16.mxu0 %v1949
        %2186 = vmatmul.mubr.bf16.gmra.mxu0 %v1948
        %v2187 = vpop.f32.mrf.mxu0
        %v2188 = vadd.f32 %v2047, %v2187
        %v2189 = vpop.f32.mrf.mxu0
        %v2190 = vpop.f32.mrf.mxu0
        %v2191 = vadd.f32 %v2047, %v2190
        %v2192 = vpop.f32.mrf.mxu0
        %2193 = vmatprep.mubr.bf16.mxu0 %v1951
        %2194 = vmatmul.mubr.bf16.gmra.mxu0 %v1950
        %v2195 = vpop.f32.mrf.mxu0
        %v2196 = vadd.f32 %v2047, %v2195
        %v2197 = vpop.f32.mrf.mxu0
        %v2198 = vpop.f32.mrf.mxu0
        %v2199 = vadd.f32 %v2047, %v2198
        %v2200 = vpop.f32.mrf.mxu0
        %2201 = vmatprep.mubr.bf16.mxu0 %v1953
        %2202 = vmatmul.mubr.bf16.gmra.mxu0 %v1952
        %v2203 = vpop.f32.mrf.mxu0
        %v2204 = vadd.f32 %v2047, %v2203
        %v2205 = vpop.f32.mrf.mxu0
        %v2206 = vpop.f32.mrf.mxu0
        %v2207 = vadd.f32 %v2047, %v2206
        %v2208 = vpop.f32.mrf.mxu0
        %2209 = vmatprep.mubr.bf16.mxu0 %v1955
        %2210 = vmatmul.mubr.bf16.gmra.mxu0 %v1954
        %v2211 = vpop.f32.mrf.mxu0
        %v2212 = vadd.f32 %v2047, %v2211
        %v2213 = vpop.f32.mrf.mxu0
        %v2214 = vpop.f32.mrf.mxu0
        %v2215 = vadd.f32 %v2047, %v2214
        %v2216 = vpop.f32.mrf.mxu0
        %2217 = vmatprep.mubr.bf16.mxu0 %v1957
        %2218 = vmatmul.mubr.bf16.gmra.mxu0 %v1956
        %v2219 = vpop.f32.mrf.mxu0
        %v2220 = vadd.f32 %v2047, %v2219
        %v2221 = vpop.f32.mrf.mxu0
        %v2222 = vpop.f32.mrf.mxu0
        %v2223 = vadd.f32 %v2047, %v2222
        %v2224 = vpop.f32.mrf.mxu0
        %2225 = vmatprep.mubr.bf16.mxu0 %v1959
        %2226 = vmatmul.mubr.bf16.gmra.mxu0 %v1958
        %v2227 = vpop.f32.mrf.mxu0
        %v2228 = vadd.f32 %v2047, %v2227
        %v2229 = vpop.f32.mrf.mxu0
        %v2230 = vpop.f32.mrf.mxu0
        %v2231 = vadd.f32 %v2047, %v2230
        %v2232 = vpop.f32.mrf.mxu0
        %2233 = vmatprep.mubr.bf16.mxu0 %v1961
        %2234 = vmatmul.mubr.bf16.gmra.mxu0 %v1960
        %v2235 = vpop.f32.mrf.mxu0
        %v2236 = vadd.f32 %v2047, %v2235
        %v2237 = vpop.f32.mrf.mxu0
        %v2238 = vpop.f32.mrf.mxu0
        %v2239 = vadd.f32 %v2047, %v2238
        %v2240 = vpop.f32.mrf.mxu0
        %2241 = vmatprep.mubr.bf16.mxu0 %v1963
        %2242 = vmatmul.mubr.bf16.gmra.mxu0 %v1962
        %v2243 = vpop.f32.mrf.mxu0
        %v2244 = vadd.f32 %v2047, %v2243
        %v2245 = vpop.f32.mrf.mxu0
        %v2246 = vpop.f32.mrf.mxu0
        %v2247 = vadd.f32 %v2047, %v2246
        %v2248 = vpop.f32.mrf.mxu0
        %2249 = vmatprep.mubr.bf16.mxu0 %v1965
        %2250 = vmatmul.mubr.bf16.gmra.mxu0 %v1964
        %v2251 = vpop.f32.mrf.mxu0
        %v2252 = vadd.f32 %v2047, %v2251
        %v2253 = vpop.f32.mrf.mxu0
        %v2254 = vpop.f32.mrf.mxu0
        %v2255 = vadd.f32 %v2047, %v2254
        %v2256 = vpop.f32.mrf.mxu0
        %2257 = vmatprep.mubr.bf16.mxu0 %v1967
        %2258 = vmatmul.mubr.bf16.gmra.mxu0 %v1966
        %v2259 = vpop.f32.mrf.mxu0
        %v2260 = vadd.f32 %v2047, %v2259
        %v2261 = vpop.f32.mrf.mxu0
        %v2262 = vpop.f32.mrf.mxu0
        %v2263 = vadd.f32 %v2047, %v2262
        %v2264 = vpop.f32.mrf.mxu0
        %2265 = vmatprep.mubr.bf16.mxu0 %v1969
        %2266 = vmatmul.mubr.bf16.gmra.mxu0 %v1968
        %v2267 = vpop.f32.mrf.mxu0
        %v2268 = vadd.f32 %v2047, %v2267
        %v2269 = vpop.f32.mrf.mxu0
        %v2270 = vpop.f32.mrf.mxu0
        %v2271 = vadd.f32 %v2047, %v2270
        %v2272 = vpop.f32.mrf.mxu0
        %2273 = vmatprep.mubr.bf16.mxu0 %v1971
        %2274 = vmatmul.mubr.bf16.gmra.mxu0 %v1970
        %v2275 = vpop.f32.mrf.mxu0
        %v2276 = vadd.f32 %v2047, %v2275
        %v2277 = vpop.f32.mrf.mxu0
        %v2278 = vpop.f32.mrf.mxu0
        %v2279 = vadd.f32 %v2047, %v2278
        %v2280 = vpop.f32.mrf.mxu0
        %2281 = vmatprep.mubr.bf16.mxu0 %v1973
        %2282 = vmatmul.mubr.bf16.gmra.mxu0 %v1972
        %v2283 = vpop.f32.mrf.mxu0
        %v2284 = vadd.f32 %v2047, %v2283
        %v2285 = vpop.f32.mrf.mxu0
        %v2286 = vpop.f32.mrf.mxu0
        %v2287 = vadd.f32 %v2047, %v2286
        %v2288 = vpop.f32.mrf.mxu0
        %2289 = vmatprep.mubr.bf16.mxu0 %v1975
        %2290 = vmatmul.mubr.bf16.gmra.mxu0 %v1974
        %v2291 = vpop.f32.mrf.mxu0
        %v2292 = vadd.f32 %v2047, %v2291
        %v2293 = vpop.f32.mrf.mxu0
        %v2294 = vpop.f32.mrf.mxu0
        %v2295 = vadd.f32 %v2047, %v2294
        %v2296 = vpop.f32.mrf.mxu0
        %2297 = vmatprep.mubr.bf16.mxu0 %v1977
        %2298 = vmatmul.mubr.bf16.gmra.mxu0 %v1976
        %v2299 = vpop.f32.mrf.mxu0
        %v2300 = vadd.f32 %v2047, %v2299
        %v2301 = vpop.f32.mrf.mxu0
        %v2302 = vpop.f32.mrf.mxu0
        %v2303 = vadd.f32 %v2047, %v2302
        %v2304 = vpop.f32.mrf.mxu0
        %2305 = vmatprep.mubr.bf16.mxu0 %v1979
        %2306 = vmatmul.mubr.bf16.gmra.mxu0 %v1978
        %v2307 = vpop.f32.mrf.mxu0
        %v2308 = vadd.f32 %v2047, %v2307
        %v2309 = vpop.f32.mrf.mxu0
        %v2310 = vpop.f32.mrf.mxu0
        %v2311 = vadd.f32 %v2047, %v2310
        %v2312 = vpop.f32.mrf.mxu0
        %2313 = vmatprep.mubr.bf16.mxu0 %v1981
        %2314 = vmatmul.mubr.bf16.gmra.mxu0 %v1980
        %v2315 = vpop.f32.mrf.mxu0
        %v2316 = vadd.f32 %v2047, %v2315
        %v2317 = vpop.f32.mrf.mxu0
        %v2318 = vpop.f32.mrf.mxu0
        %v2319 = vadd.f32 %v2047, %v2318
        %v2320 = vpop.f32.mrf.mxu0
        %2321 = vmatprep.mubr.bf16.mxu0 %v1983
        %2322 = vmatmul.mubr.bf16.gmra.mxu0 %v1982
        %v2323 = vpop.f32.mrf.mxu0
        %v2324 = vadd.f32 %v2047, %v2323
        %v2325 = vpop.f32.mrf.mxu0
        %v2326 = vpop.f32.mrf.mxu0
        %v2327 = vadd.f32 %v2047, %v2326
        %v2328 = vpop.f32.mrf.mxu0
        %2329 = vmatprep.mubr.bf16.mxu0 %v1985
        %2330 = vmatmul.mubr.bf16.gmra.mxu0 %v1984
        %v2331 = vpop.f32.mrf.mxu0
        %v2332 = vadd.f32 %v2047, %v2331
        %v2333 = vpop.f32.mrf.mxu0
        %v2334 = vpop.f32.mrf.mxu0
        %v2335 = vadd.f32 %v2047, %v2334
        %v2336 = vpop.f32.mrf.mxu0
        %2337 = vmatprep.mubr.bf16.mxu0 %v1987
        %2338 = vmatmul.mubr.bf16.gmra.mxu0 %v1986
        %v2339 = vpop.f32.mrf.mxu0
        %v2340 = vadd.f32 %v2047, %v2339
        %v2341 = vpop.f32.mrf.mxu0
        %v2342 = vpop.f32.mrf.mxu0
        %v2343 = vadd.f32 %v2047, %v2342
        %v2344 = vpop.f32.mrf.mxu0
        %2345 = vmatprep.mubr.bf16.mxu0 %v1989
        %2346 = vmatmul.mubr.bf16.gmra.mxu0 %v1988
        %v2347 = vpop.f32.mrf.mxu0
        %v2348 = vadd.f32 %v2047, %v2347
        %v2349 = vpop.f32.mrf.mxu0
        %v2350 = vpop.f32.mrf.mxu0
        %v2351 = vadd.f32 %v2047, %v2350
        %v2352 = vpop.f32.mrf.mxu0
        %2353 = vmatprep.mubr.bf16.mxu0 %v1991
        %2354 = vmatmul.mubr.bf16.gmra.mxu0 %v1990
        %v2355 = vpop.f32.mrf.mxu0
        %v2356 = vadd.f32 %v2047, %v2355
        %v2357 = vpop.f32.mrf.mxu0
        %v2358 = vpop.f32.mrf.mxu0
        %v2359 = vadd.f32 %v2047, %v2358
        %v2360 = vpop.f32.mrf.mxu0
        %2361 = vmatprep.mubr.bf16.mxu0 %v1993
        %2362 = vmatmul.mubr.bf16.gmra.mxu0 %v1992
        %v2363 = vpop.f32.mrf.mxu0
        %v2364 = vadd.f32 %v2047, %v2363
        %v2365 = vpop.f32.mrf.mxu0
        %v2366 = vpop.f32.mrf.mxu0
        %v2367 = vadd.f32 %v2047, %v2366
        %v2368 = vpop.f32.mrf.mxu0
        %2369 = vmatprep.mubr.bf16.mxu0 %v1995
        %2370 = vmatmul.mubr.bf16.gmra.mxu0 %v1994
        %v2371 = vpop.f32.mrf.mxu0
        %v2372 = vadd.f32 %v2047, %v2371
        %v2373 = vpop.f32.mrf.mxu0
        %v2374 = vpop.f32.mrf.mxu0
        %v2375 = vadd.f32 %v2047, %v2374
        %v2376 = vpop.f32.mrf.mxu0
        %2377 = vmatprep.mubr.bf16.mxu0 %v1997
        %2378 = vmatmul.mubr.bf16.gmra.mxu0 %v1996
        %v2379 = vpop.f32.mrf.mxu0
        %v2380 = vadd.f32 %v2047, %v2379
        %v2381 = vpop.f32.mrf.mxu0
        %v2382 = vpop.f32.mrf.mxu0
        %v2383 = vadd.f32 %v2047, %v2382
        %v2384 = vpop.f32.mrf.mxu0
        %2385 = vmatprep.mubr.bf16.mxu0 %v1999
        %2386 = vmatmul.mubr.bf16.gmra.mxu0 %v1998
        %v2387 = vpop.f32.mrf.mxu0
        %v2388 = vadd.f32 %v2047, %v2387
        %v2389 = vpop.f32.mrf.mxu0
        %v2390 = vpop.f32.mrf.mxu0
        %v2391 = vadd.f32 %v2047, %v2390
        %v2392 = vpop.f32.mrf.mxu0
        %2393 = vmatprep.mubr.bf16.mxu0 %v2001
        %2394 = vmatmul.mubr.bf16.gmra.mxu0 %v2000
        %v2395 = vpop.f32.mrf.mxu0
        %v2396 = vadd.f32 %v2047, %v2395
        %v2397 = vpop.f32.mrf.mxu0
        %v2398 = vpop.f32.mrf.mxu0
        %v2399 = vadd.f32 %v2047, %v2398
        %v2400 = vpop.f32.mrf.mxu0
        %2401 = vmatprep.mubr.bf16.mxu0 %v2003
        %2402 = vmatmul.mubr.bf16.gmra.mxu0 %v2002
        %v2403 = vpop.f32.mrf.mxu0
        %v2404 = vadd.f32 %v2047, %v2403
        %v2405 = vpop.f32.mrf.mxu0
        %v2406 = vpop.f32.mrf.mxu0
        %v2407 = vadd.f32 %v2047, %v2406
        %v2408 = vpop.f32.mrf.mxu0
        %2409 = vmatprep.mubr.bf16.mxu0 %v2005
        %2410 = vmatmul.mubr.bf16.gmra.mxu0 %v2004
        %v2411 = vpop.f32.mrf.mxu0
        %v2412 = vadd.f32 %v2047, %v2411
        %v2413 = vpop.f32.mrf.mxu0
        %v2414 = vpop.f32.mrf.mxu0
        %v2415 = vadd.f32 %v2047, %v2414
        %v2416 = vpop.f32.mrf.mxu0
        %2417 = vmatprep.mubr.bf16.mxu0 %v2007
        %2418 = vmatmul.mubr.bf16.gmra.mxu0 %v2006
        %v2419 = vpop.f32.mrf.mxu0
        %v2420 = vadd.f32 %v2047, %v2419
        %v2421 = vpop.f32.mrf.mxu0
        %v2422 = vpop.f32.mrf.mxu0
        %v2423 = vadd.f32 %v2047, %v2422
        %v2424 = vpop.f32.mrf.mxu0
        %2425 = vmatprep.mubr.bf16.mxu0 %v2009
        %2426 = vmatmul.mubr.bf16.gmra.mxu0 %v2008
        %v2427 = vpop.f32.mrf.mxu0
        %v2428 = vadd.f32 %v2047, %v2427
        %v2429 = vpop.f32.mrf.mxu0
        %v2430 = vpop.f32.mrf.mxu0
        %v2431 = vadd.f32 %v2047, %v2430
        %v2432 = vpop.f32.mrf.mxu0
        %2433 = vdwg.mxu0
        %v2434 = vmax.f32 %v2180, 0.0
        %v2435 = vmax.f32 %v2183, 0.0
        %v2436 = vmax.f32 %v2188, 0.0
        %v2437 = vmax.f32 %v2191, 0.0
        %v2438 = vmax.f32 %v2196, 0.0
        %v2439 = vmax.f32 %v2199, 0.0
        %v2440 = vmax.f32 %v2204, 0.0
        %v2441 = vmax.f32 %v2207, 0.0
        %v2442 = vmax.f32 %v2212, 0.0
        %v2443 = vmax.f32 %v2215, 0.0
        %v2444 = vmax.f32 %v2220, 0.0
        %v2445 = vmax.f32 %v2223, 0.0
        %v2446 = vmax.f32 %v2228, 0.0
        %v2447 = vmax.f32 %v2231, 0.0
        %v2448 = vmax.f32 %v2236, 0.0
        %v2449 = vmax.f32 %v2239, 0.0
        %v2450 = vmax.f32 %v2244, 0.0
        %v2451 = vmax.f32 %v2247, 0.0
        %v2452 = vmax.f32 %v2252, 0.0
        %v2453 = vmax.f32 %v2255, 0.0
        %v2454 = vmax.f32 %v2260, 0.0
        %v2455 = vmax.f32 %v2263, 0.0
        %v2456 = vmax.f32 %v2268, 0.0
        %v2457 = vmax.f32 %v2271, 0.0
        %v2458 = vmax.f32 %v2276, 0.0
        %v2459 = vmax.f32 %v2279, 0.0
        %v2460 = vmax.f32 %v2284, 0.0
        %v2461 = vmax.f32 %v2287, 0.0
        %v2462 = vmax.f32 %v2292, 0.0
        %v2463 = vmax.f32 %v2295, 0.0
        %v2464 = vmax.f32 %v2300, 0.0
        %v2465 = vmax.f32 %v2303, 0.0
        %v2466 = vmax.f32 %v2308, 0.0
        %v2467 = vmax.f32 %v2311, 0.0
        %v2468 = vmax.f32 %v2316, 0.0
        %v2469 = vmax.f32 %v2319, 0.0
        %v2470 = vmax.f32 %v2324, 0.0
        %v2471 = vmax.f32 %v2327, 0.0
        %v2472 = vmax.f32 %v2332, 0.0
        %v2473 = vmax.f32 %v2335, 0.0
        %v2474 = vmax.f32 %v2340, 0.0
        %v2475 = vmax.f32 %v2343, 0.0
        %v2476 = vmax.f32 %v2348, 0.0
        %v2477 = vmax.f32 %v2351, 0.0
        %v2478 = vmax.f32 %v2356, 0.0
        %v2479 = vmax.f32 %v2359, 0.0
        %v2480 = vmax.f32 %v2364, 0.0
        %v2481 = vmax.f32 %v2367, 0.0
        %v2482 = vmax.f32 %v2372, 0.0
        %v2483 = vmax.f32 %v2375, 0.0
        %v2484 = vmax.f32 %v2380, 0.0
        %v2485 = vmax.f32 %v2383, 0.0
        %v2486 = vmax.f32 %v2388, 0.0
        %v2487 = vmax.f32 %v2391, 0.0
        %v2488 = vmax.f32 %v2396, 0.0
        %v2489 = vmax.f32 %v2399, 0.0
        %v2490 = vmax.f32 %v2404, 0.0
        %v2491 = vmax.f32 %v2407, 0.0
        %v2492 = vmax.f32 %v2412, 0.0
        %v2493 = vmax.f32 %v2415, 0.0
        %v2494 = vmax.f32 %v2420, 0.0
        %v2495 = vmax.f32 %v2423, 0.0
        %v2496 = vmax.f32 %v2428, 0.0
        %v2497 = vmax.f32 %v2431, 0.0
        %v2498 = vpack.c.bf16 %v2435, %v2434
        %v2499 = vpack.c.bf16 %v2437, %v2436
        %v2500 = vpack.c.bf16 %v2439, %v2438
        %v2501 = vpack.c.bf16 %v2441, %v2440
        %v2502 = vpack.c.bf16 %v2443, %v2442
        %v2503 = vpack.c.bf16 %v2445, %v2444
        %v2504 = vpack.c.bf16 %v2447, %v2446
        %v2505 = vpack.c.bf16 %v2449, %v2448
        %v2506 = vpack.c.bf16 %v2451, %v2450
        %v2507 = vpack.c.bf16 %v2453, %v2452
        %v2508 = vpack.c.bf16 %v2455, %v2454
        %v2509 = vpack.c.bf16 %v2457, %v2456
        %v2510 = vpack.c.bf16 %v2459, %v2458
        %v2511 = vpack.c.bf16 %v2461, %v2460
        %v2512 = vpack.c.bf16 %v2463, %v2462
        %v2513 = vpack.c.bf16 %v2465, %v2464
        %v2514 = vpack.c.bf16 %v2467, %v2466
        %v2515 = vpack.c.bf16 %v2469, %v2468
        %v2516 = vpack.c.bf16 %v2471, %v2470
        %v2517 = vpack.c.bf16 %v2473, %v2472
        %v2518 = vpack.c.bf16 %v2475, %v2474
        %v2519 = vpack.c.bf16 %v2477, %v2476
        %v2520 = vpack.c.bf16 %v2479, %v2478
        %v2521 = vpack.c.bf16 %v2481, %v2480
        %v2522 = vpack.c.bf16 %v2483, %v2482
        %v2523 = vpack.c.bf16 %v2485, %v2484
        %v2524 = vpack.c.bf16 %v2487, %v2486
        %v2525 = vpack.c.bf16 %v2489, %v2488
        %v2526 = vpack.c.bf16 %v2491, %v2490
        %v2527 = vpack.c.bf16 %v2493, %v2492
        %v2528 = vpack.c.bf16 %v2495, %v2494
        %v2529 = vpack.c.bf16 %v2497, %v2496
        %v2530 = vld [vmem:[%s7] sm:$0xf]
        %v2531 = vld [vmem:[%s7 + $0x4] sm:$0xf]
        %v2532 = vld [vmem:[%s7 + $0x8] sm:$0xf]
        %v2533 = vld [vmem:[%s7 + $0xc] sm:$0xf]
        %v2534 = vld [vmem:[%s8] sm:$0x1]
        %v2536 = vlaneseq
        %v2537 = vshrl.u32 %v2536, 7
        %v2538 = vsub.s32 0, %v2537
        %v2539 = vrot.slane %v2534, %v2538
        %v2545 = vunpack.c.l.b16 %v2530
        %v2546 = vunpack.c.l.b16 %v2531
        %v2547 = vunpack.c.l.b16 %v2532
        %v2548 = vunpack.c.l.b16 %v2533
        %v2549 = vpack.c.b16 %v2546, %v2545
        %v2550 = vpack.c.b16 %v2548, %v2547
        %vm2553 = vcmask 261120
        %v2555 = vsel %vm2553, %v2498, 0
        %v2558 = vsel %vm2553, %v2499, 0
        %v2561 = vsel %vm2553, %v2500, 0
        %v2564 = vsel %vm2553, %v2501, 0
        %v2567 = vsel %vm2553, %v2502, 0
        %v2570 = vsel %vm2553, %v2503, 0
        %v2573 = vsel %vm2553, %v2504, 0
        %v2576 = vsel %vm2553, %v2505, 0
        %v2579 = vsel %vm2553, %v2506, 0
        %v2582 = vsel %vm2553, %v2507, 0
        %v2585 = vsel %vm2553, %v2508, 0
        %v2588 = vsel %vm2553, %v2509, 0
        %v2591 = vsel %vm2553, %v2510, 0
        %v2594 = vsel %vm2553, %v2511, 0
        %v2597 = vsel %vm2553, %v2512, 0
        %v2600 = vsel %vm2553, %v2513, 0
        %v2603 = vsel %vm2553, %v2514, 0
        %v2606 = vsel %vm2553, %v2515, 0
        %v2609 = vsel %vm2553, %v2516, 0
        %v2612 = vsel %vm2553, %v2517, 0
        %v2615 = vsel %vm2553, %v2518, 0
        %v2618 = vsel %vm2553, %v2519, 0
        %v2621 = vsel %vm2553, %v2520, 0
        %v2624 = vsel %vm2553, %v2521, 0
        %v2627 = vsel %vm2553, %v2522, 0
        %v2630 = vsel %vm2553, %v2523, 0
        %v2633 = vsel %vm2553, %v2524, 0
        %v2636 = vsel %vm2553, %v2525, 0
        %v2639 = vsel %vm2553, %v2526, 0
        %v2642 = vsel %vm2553, %v2527, 0
        %v2645 = vsel %vm2553, %v2528, 0
        %v2648 = vsel %vm2553, %v2529, 0
        %2650 = vmatprep.subr.bf16.mxu0 0
        %2651 = vmatpush1.bf16.msra.mxu0 0
        %2652 = vmatprep.subr.bf16.mxu0 0
        %2653 = vmatpush1.bf16.msra.mxu0 0
        %2654 = vmatprep.subr.bf16.mxu0 0
        %2655 = vmatpush1.bf16.msra.mxu0 0
        %2656 = vmatprep.subr.bf16.mxu0 0
        %2657 = vmatpush1.bf16.msra.mxu0 0
        %2658 = vmatprep.subr.bf16.mxu0 0
        %2659 = vmatpush1.bf16.msra.mxu0 0
        %2660 = vmatprep.subr.bf16.mxu0 0
        %2661 = vmatpush1.bf16.msra.mxu0 0
        %2662 = vmatprep.subr.bf16.mxu0 0
        %2663 = vmatpush1.bf16.msra.mxu0 %v2550
        %2664 = vmatprep.subr.bf16.mxu0 0
        %2665 = vmatpush1.bf16.msra.mxu0 %v2549
        %2666 = vmatprep.subr.bf16.mxu0 0
        %2667 = vmatpush2.bf16.msra.mxu0 0
        %2668 = vmatprep.subr.bf16.mxu0 0
        %2669 = vmatpush2.bf16.msra.mxu0 0
        %2670 = vmatprep.subr.bf16.mxu0 0
        %2671 = vmatpush2.bf16.msra.mxu0 0
        %2672 = vmatprep.subr.bf16.mxu0 0
        %2673 = vmatpush2.bf16.msra.mxu0 0
        %2674 = vmatprep.subr.bf16.mxu0 0
        %2675 = vmatpush2.bf16.msra.mxu0 0
        %2676 = vmatprep.subr.bf16.mxu0 0
        %2677 = vmatpush2.bf16.msra.mxu0 0
        %2678 = vmatprep.subr.bf16.mxu0 0
        %2679 = vmatpush2.bf16.msra.mxu0 0
        %2680 = vmatprep.subr.bf16.mxu0 0
        %2681 = vmatpush2.bf16.msra.mxu0 0
        %2682 = vmatprep.mubr.bf16.mxu0 0
        %2683 = vmatmul.mubr.bf16.gmra.mxu0 %v2555
        %v2684 = vpop.f32.mrf.mxu0
        %v2685 = vadd.f32 %v2539, %v2684
        %v2686 = vpop.f32.mrf.mxu0
        %v2687 = vpop.f32.mrf.mxu0
        %v2688 = vadd.f32 %v2539, %v2687
        %v2689 = vpop.f32.mrf.mxu0
        %2690 = vmatprep.mubr.bf16.mxu0 0
        %2691 = vmatmul.mubr.bf16.gmra.mxu0 %v2558
        %v2692 = vpop.f32.mrf.mxu0
        %v2693 = vadd.f32 %v2539, %v2692
        %v2694 = vpop.f32.mrf.mxu0
        %v2695 = vpop.f32.mrf.mxu0
        %v2696 = vadd.f32 %v2539, %v2695
        %v2697 = vpop.f32.mrf.mxu0
        %2698 = vmatprep.mubr.bf16.mxu0 0
        %2699 = vmatmul.mubr.bf16.gmra.mxu0 %v2561
        %v2700 = vpop.f32.mrf.mxu0
        %v2701 = vadd.f32 %v2539, %v2700
        %v2702 = vpop.f32.mrf.mxu0
        %v2703 = vpop.f32.mrf.mxu0
        %v2704 = vadd.f32 %v2539, %v2703
        %v2705 = vpop.f32.mrf.mxu0
        %2706 = vmatprep.mubr.bf16.mxu0 0
        %2707 = vmatmul.mubr.bf16.gmra.mxu0 %v2564
        %v2708 = vpop.f32.mrf.mxu0
        %v2709 = vadd.f32 %v2539, %v2708
        %v2710 = vpop.f32.mrf.mxu0
        %v2711 = vpop.f32.mrf.mxu0
        %v2712 = vadd.f32 %v2539, %v2711
        %v2713 = vpop.f32.mrf.mxu0
        %2714 = vmatprep.mubr.bf16.mxu0 0
        %2715 = vmatmul.mubr.bf16.gmra.mxu0 %v2567
        %v2716 = vpop.f32.mrf.mxu0
        %v2717 = vadd.f32 %v2539, %v2716
        %v2718 = vpop.f32.mrf.mxu0
        %v2719 = vpop.f32.mrf.mxu0
        %v2720 = vadd.f32 %v2539, %v2719
        %v2721 = vpop.f32.mrf.mxu0
        %2722 = vmatprep.mubr.bf16.mxu0 0
        %2723 = vmatmul.mubr.bf16.gmra.mxu0 %v2570
        %v2724 = vpop.f32.mrf.mxu0
        %v2725 = vadd.f32 %v2539, %v2724
        %v2726 = vpop.f32.mrf.mxu0
        %v2727 = vpop.f32.mrf.mxu0
        %v2728 = vadd.f32 %v2539, %v2727
        %v2729 = vpop.f32.mrf.mxu0
        %2730 = vmatprep.mubr.bf16.mxu0 0
        %2731 = vmatmul.mubr.bf16.gmra.mxu0 %v2573
        %v2732 = vpop.f32.mrf.mxu0
        %v2733 = vadd.f32 %v2539, %v2732
        %v2734 = vpop.f32.mrf.mxu0
        %v2735 = vpop.f32.mrf.mxu0
        %v2736 = vadd.f32 %v2539, %v2735
        %v2737 = vpop.f32.mrf.mxu0
        %2738 = vmatprep.mubr.bf16.mxu0 0
        %2739 = vmatmul.mubr.bf16.gmra.mxu0 %v2576
        %v2740 = vpop.f32.mrf.mxu0
        %v2741 = vadd.f32 %v2539, %v2740
        %v2742 = vpop.f32.mrf.mxu0
        %v2743 = vpop.f32.mrf.mxu0
        %v2744 = vadd.f32 %v2539, %v2743
        %v2745 = vpop.f32.mrf.mxu0
        %2746 = vmatprep.mubr.bf16.mxu0 0
        %2747 = vmatmul.mubr.bf16.gmra.mxu0 %v2579
        %v2748 = vpop.f32.mrf.mxu0
        %v2749 = vadd.f32 %v2539, %v2748
        %v2750 = vpop.f32.mrf.mxu0
        %v2751 = vpop.f32.mrf.mxu0
        %v2752 = vadd.f32 %v2539, %v2751
        %v2753 = vpop.f32.mrf.mxu0
        %2754 = vmatprep.mubr.bf16.mxu0 0
        %2755 = vmatmul.mubr.bf16.gmra.mxu0 %v2582
        %v2756 = vpop.f32.mrf.mxu0
        %v2757 = vadd.f32 %v2539, %v2756
        %v2758 = vpop.f32.mrf.mxu0
        %v2759 = vpop.f32.mrf.mxu0
        %v2760 = vadd.f32 %v2539, %v2759
        %v2761 = vpop.f32.mrf.mxu0
        %2762 = vmatprep.mubr.bf16.mxu0 0
        %2763 = vmatmul.mubr.bf16.gmra.mxu0 %v2585
        %v2764 = vpop.f32.mrf.mxu0
        %v2765 = vadd.f32 %v2539, %v2764
        %v2766 = vpop.f32.mrf.mxu0
        %v2767 = vpop.f32.mrf.mxu0
        %v2768 = vadd.f32 %v2539, %v2767
        %v2769 = vpop.f32.mrf.mxu0
        %2770 = vmatprep.mubr.bf16.mxu0 0
        %2771 = vmatmul.mubr.bf16.gmra.mxu0 %v2588
        %v2772 = vpop.f32.mrf.mxu0
        %v2773 = vadd.f32 %v2539, %v2772
        %v2774 = vpop.f32.mrf.mxu0
        %v2775 = vpop.f32.mrf.mxu0
        %v2776 = vadd.f32 %v2539, %v2775
        %v2777 = vpop.f32.mrf.mxu0
        %2778 = vmatprep.mubr.bf16.mxu0 0
        %2779 = vmatmul.mubr.bf16.gmra.mxu0 %v2591
        %v2780 = vpop.f32.mrf.mxu0
        %v2781 = vadd.f32 %v2539, %v2780
        %v2782 = vpop.f32.mrf.mxu0
        %v2783 = vpop.f32.mrf.mxu0
        %v2784 = vadd.f32 %v2539, %v2783
        %v2785 = vpop.f32.mrf.mxu0
        %2786 = vmatprep.mubr.bf16.mxu0 0
        %2787 = vmatmul.mubr.bf16.gmra.mxu0 %v2594
        %v2788 = vpop.f32.mrf.mxu0
        %v2789 = vadd.f32 %v2539, %v2788
        %v2790 = vpop.f32.mrf.mxu0
        %v2791 = vpop.f32.mrf.mxu0
        %v2792 = vadd.f32 %v2539, %v2791
        %v2793 = vpop.f32.mrf.mxu0
        %2794 = vmatprep.mubr.bf16.mxu0 0
        %2795 = vmatmul.mubr.bf16.gmra.mxu0 %v2597
        %v2796 = vpop.f32.mrf.mxu0
        %v2797 = vadd.f32 %v2539, %v2796
        %v2798 = vpop.f32.mrf.mxu0
        %v2799 = vpop.f32.mrf.mxu0
        %v2800 = vadd.f32 %v2539, %v2799
        %v2801 = vpop.f32.mrf.mxu0
        %2802 = vmatprep.mubr.bf16.mxu0 0
        %2803 = vmatmul.mubr.bf16.gmra.mxu0 %v2600
        %v2804 = vpop.f32.mrf.mxu0
        %v2805 = vadd.f32 %v2539, %v2804
        %v2806 = vpop.f32.mrf.mxu0
        %v2807 = vpop.f32.mrf.mxu0
        %v2808 = vadd.f32 %v2539, %v2807
        %v2809 = vpop.f32.mrf.mxu0
        %2810 = vmatprep.mubr.bf16.mxu0 0
        %2811 = vmatmul.mubr.bf16.gmra.mxu0 %v2603
        %v2812 = vpop.f32.mrf.mxu0
        %v2813 = vadd.f32 %v2539, %v2812
        %v2814 = vpop.f32.mrf.mxu0
        %v2815 = vpop.f32.mrf.mxu0
        %v2816 = vadd.f32 %v2539, %v2815
        %v2817 = vpop.f32.mrf.mxu0
        %2818 = vmatprep.mubr.bf16.mxu0 0
        %2819 = vmatmul.mubr.bf16.gmra.mxu0 %v2606
        %v2820 = vpop.f32.mrf.mxu0
        %v2821 = vadd.f32 %v2539, %v2820
        %v2822 = vpop.f32.mrf.mxu0
        %v2823 = vpop.f32.mrf.mxu0
        %v2824 = vadd.f32 %v2539, %v2823
        %v2825 = vpop.f32.mrf.mxu0
        %2826 = vmatprep.mubr.bf16.mxu0 0
        %2827 = vmatmul.mubr.bf16.gmra.mxu0 %v2609
        %v2828 = vpop.f32.mrf.mxu0
        %v2829 = vadd.f32 %v2539, %v2828
        %v2830 = vpop.f32.mrf.mxu0
        %v2831 = vpop.f32.mrf.mxu0
        %v2832 = vadd.f32 %v2539, %v2831
        %v2833 = vpop.f32.mrf.mxu0
        %2834 = vmatprep.mubr.bf16.mxu0 0
        %2835 = vmatmul.mubr.bf16.gmra.mxu0 %v2612
        %v2836 = vpop.f32.mrf.mxu0
        %v2837 = vadd.f32 %v2539, %v2836
        %v2838 = vpop.f32.mrf.mxu0
        %v2839 = vpop.f32.mrf.mxu0
        %v2840 = vadd.f32 %v2539, %v2839
        %v2841 = vpop.f32.mrf.mxu0
        %2842 = vmatprep.mubr.bf16.mxu0 0
        %2843 = vmatmul.mubr.bf16.gmra.mxu0 %v2615
        %v2844 = vpop.f32.mrf.mxu0
        %v2845 = vadd.f32 %v2539, %v2844
        %v2846 = vpop.f32.mrf.mxu0
        %v2847 = vpop.f32.mrf.mxu0
        %v2848 = vadd.f32 %v2539, %v2847
        %v2849 = vpop.f32.mrf.mxu0
        %2850 = vmatprep.mubr.bf16.mxu0 0
        %2851 = vmatmul.mubr.bf16.gmra.mxu0 %v2618
        %v2852 = vpop.f32.mrf.mxu0
        %v2853 = vadd.f32 %v2539, %v2852
        %v2854 = vpop.f32.mrf.mxu0
        %v2855 = vpop.f32.mrf.mxu0
        %v2856 = vadd.f32 %v2539, %v2855
        %v2857 = vpop.f32.mrf.mxu0
        %2858 = vmatprep.mubr.bf16.mxu0 0
        %2859 = vmatmul.mubr.bf16.gmra.mxu0 %v2621
        %v2860 = vpop.f32.mrf.mxu0
        %v2861 = vadd.f32 %v2539, %v2860
        %v2862 = vpop.f32.mrf.mxu0
        %v2863 = vpop.f32.mrf.mxu0
        %v2864 = vadd.f32 %v2539, %v2863
        %v2865 = vpop.f32.mrf.mxu0
        %2866 = vmatprep.mubr.bf16.mxu0 0
        %2867 = vmatmul.mubr.bf16.gmra.mxu0 %v2624
        %v2868 = vpop.f32.mrf.mxu0
        %v2869 = vadd.f32 %v2539, %v2868
        %v2870 = vpop.f32.mrf.mxu0
        %v2871 = vpop.f32.mrf.mxu0
        %v2872 = vadd.f32 %v2539, %v2871
        %v2873 = vpop.f32.mrf.mxu0
        %2874 = vmatprep.mubr.bf16.mxu0 0
        %2875 = vmatmul.mubr.bf16.gmra.mxu0 %v2627
        %v2876 = vpop.f32.mrf.mxu0
        %v2877 = vadd.f32 %v2539, %v2876
        %v2878 = vpop.f32.mrf.mxu0
        %v2879 = vpop.f32.mrf.mxu0
        %v2880 = vadd.f32 %v2539, %v2879
        %v2881 = vpop.f32.mrf.mxu0
        %2882 = vmatprep.mubr.bf16.mxu0 0
        %2883 = vmatmul.mubr.bf16.gmra.mxu0 %v2630
        %v2884 = vpop.f32.mrf.mxu0
        %v2885 = vadd.f32 %v2539, %v2884
        %v2886 = vpop.f32.mrf.mxu0
        %v2887 = vpop.f32.mrf.mxu0
        %v2888 = vadd.f32 %v2539, %v2887
        %v2889 = vpop.f32.mrf.mxu0
        %2890 = vmatprep.mubr.bf16.mxu0 0
        %2891 = vmatmul.mubr.bf16.gmra.mxu0 %v2633
        %v2892 = vpop.f32.mrf.mxu0
        %v2893 = vadd.f32 %v2539, %v2892
        %v2894 = vpop.f32.mrf.mxu0
        %v2895 = vpop.f32.mrf.mxu0
        %v2896 = vadd.f32 %v2539, %v2895
        %v2897 = vpop.f32.mrf.mxu0
        %2898 = vmatprep.mubr.bf16.mxu0 0
        %2899 = vmatmul.mubr.bf16.gmra.mxu0 %v2636
        %v2900 = vpop.f32.mrf.mxu0
        %v2901 = vadd.f32 %v2539, %v2900
        %v2902 = vpop.f32.mrf.mxu0
        %v2903 = vpop.f32.mrf.mxu0
        %v2904 = vadd.f32 %v2539, %v2903
        %v2905 = vpop.f32.mrf.mxu0
        %2906 = vmatprep.mubr.bf16.mxu0 0
        %2907 = vmatmul.mubr.bf16.gmra.mxu0 %v2639
        %v2908 = vpop.f32.mrf.mxu0
        %v2909 = vadd.f32 %v2539, %v2908
        %v2910 = vpop.f32.mrf.mxu0
        %v2911 = vpop.f32.mrf.mxu0
        %v2912 = vadd.f32 %v2539, %v2911
        %v2913 = vpop.f32.mrf.mxu0
        %2914 = vmatprep.mubr.bf16.mxu0 0
        %2915 = vmatmul.mubr.bf16.gmra.mxu0 %v2642
        %v2916 = vpop.f32.mrf.mxu0
        %v2917 = vadd.f32 %v2539, %v2916
        %v2918 = vpop.f32.mrf.mxu0
        %v2919 = vpop.f32.mrf.mxu0
        %v2920 = vadd.f32 %v2539, %v2919
        %v2921 = vpop.f32.mrf.mxu0
        %2922 = vmatprep.mubr.bf16.mxu0 0
        %2923 = vmatmul.mubr.bf16.gmra.mxu0 %v2645
        %v2924 = vpop.f32.mrf.mxu0
        %v2925 = vadd.f32 %v2539, %v2924
        %v2926 = vpop.f32.mrf.mxu0
        %v2927 = vpop.f32.mrf.mxu0
        %v2928 = vadd.f32 %v2539, %v2927
        %v2929 = vpop.f32.mrf.mxu0
        %2930 = vmatprep.mubr.bf16.mxu0 0
        %2931 = vmatmul.mubr.bf16.gmra.mxu0 %v2648
        %v2932 = vpop.f32.mrf.mxu0
        %v2933 = vadd.f32 %v2539, %v2932
        %v2934 = vpop.f32.mrf.mxu0
        %v2935 = vpop.f32.mrf.mxu0
        %v2936 = vadd.f32 %v2539, %v2935
        %v2937 = vpop.f32.mrf.mxu0
        %2938 = vdwg.mxu0
        %2939 = vst [vmem:[%s326] sm:$0xff] %v2685
        %2940 = vst [vmem:[%s326 + $0x8] sm:$0xff] %v2688
        %2941 = vst [vmem:[%s326 + $0x10] sm:$0xff] %v2693
        %2942 = vst [vmem:[%s326 + $0x18] sm:$0xff] %v2696
        %2943 = vst [vmem:[%s326 + $0x20] sm:$0xff] %v2701
        %2944 = vst [vmem:[%s326 + $0x28] sm:$0xff] %v2704
        %2945 = vst [vmem:[%s326 + $0x30] sm:$0xff] %v2709
        %2946 = vst [vmem:[%s326 + $0x38] sm:$0xff] %v2712
        %2947 = vst [vmem:[%s326 + $0x40] sm:$0xff] %v2717
        %2948 = vst [vmem:[%s326 + $0x48] sm:$0xff] %v2720
        %2949 = vst [vmem:[%s326 + $0x50] sm:$0xff] %v2725
        %2950 = vst [vmem:[%s326 + $0x58] sm:$0xff] %v2728
        %2951 = vst [vmem:[%s326 + $0x60] sm:$0xff] %v2733
        %2952 = vst [vmem:[%s326 + $0x68] sm:$0xff] %v2736
        %2953 = vst [vmem:[%s326 + $0x70] sm:$0xff] %v2741
        %2954 = vst [vmem:[%s326 + $0x78] sm:$0xff] %v2744
        %2955 = vst [vmem:[%s326 + $0x80] sm:$0xff] %v2749
        %2956 = vst [vmem:[%s326 + $0x88] sm:$0xff] %v2752
        %2957 = vst [vmem:[%s326 + $0x90] sm:$0xff] %v2757
        %2958 = vst [vmem:[%s326 + $0x98] sm:$0xff] %v2760
        %2959 = vst [vmem:[%s326 + $0xa0] sm:$0xff] %v2765
        %2960 = vst [vmem:[%s326 + $0xa8] sm:$0xff] %v2768
        %2961 = vst [vmem:[%s326 + $0xb0] sm:$0xff] %v2773
        %2962 = vst [vmem:[%s326 + $0xb8] sm:$0xff] %v2776
        %2963 = vst [vmem:[%s326 + $0xc0] sm:$0xff] %v2781
        %2964 = vst [vmem:[%s326 + $0xc8] sm:$0xff] %v2784
        %2965 = vst [vmem:[%s326 + $0xd0] sm:$0xff] %v2789
        %2966 = vst [vmem:[%s326 + $0xd8] sm:$0xff] %v2792
        %2967 = vst [vmem:[%s326 + $0xe0] sm:$0xff] %v2797
        %2968 = vst [vmem:[%s326 + $0xe8] sm:$0xff] %v2800
        %2969 = vst [vmem:[%s326 + $0xf0] sm:$0xff] %v2805
        %2970 = vst [vmem:[%s326 + $0xf8] sm:$0xff] %v2808
        %2971 = vst [vmem:[%s326 + $0x100] sm:$0xff] %v2813
        %2972 = vst [vmem:[%s326 + $0x108] sm:$0xff] %v2816
        %2973 = vst [vmem:[%s326 + $0x110] sm:$0xff] %v2821
        %2974 = vst [vmem:[%s326 + $0x118] sm:$0xff] %v2824
        %2975 = vst [vmem:[%s326 + $0x120] sm:$0xff] %v2829
        %2976 = vst [vmem:[%s326 + $0x128] sm:$0xff] %v2832
        %2977 = vst [vmem:[%s326 + $0x130] sm:$0xff] %v2837
        %2978 = vst [vmem:[%s326 + $0x138] sm:$0xff] %v2840
        %2979 = vst [vmem:[%s326 + $0x140] sm:$0xff] %v2845
        %2980 = vst [vmem:[%s326 + $0x148] sm:$0xff] %v2848
        %2981 = vst [vmem:[%s326 + $0x150] sm:$0xff] %v2853
        %2982 = vst [vmem:[%s326 + $0x158] sm:$0xff] %v2856
        %2983 = vst [vmem:[%s326 + $0x160] sm:$0xff] %v2861
        %2984 = vst [vmem:[%s326 + $0x168] sm:$0xff] %v2864
        %2985 = vst [vmem:[%s326 + $0x170] sm:$0xff] %v2869
        %2986 = vst [vmem:[%s326 + $0x178] sm:$0xff] %v2872
        %2987 = vst [vmem:[%s326 + $0x180] sm:$0xff] %v2877
        %2988 = vst [vmem:[%s326 + $0x188] sm:$0xff] %v2880
        %2989 = vst [vmem:[%s326 + $0x190] sm:$0xff] %v2885
        %2990 = vst [vmem:[%s326 + $0x198] sm:$0xff] %v2888
        %2991 = vst [vmem:[%s326 + $0x1a0] sm:$0xff] %v2893
        %2992 = vst [vmem:[%s326 + $0x1a8] sm:$0xff] %v2896
        %2993 = vst [vmem:[%s326 + $0x1b0] sm:$0xff] %v2901
        %2994 = vst [vmem:[%s326 + $0x1b8] sm:$0xff] %v2904
        %2995 = vst [vmem:[%s326 + $0x1c0] sm:$0xff] %v2909
        %2996 = vst [vmem:[%s326 + $0x1c8] sm:$0xff] %v2912
        %2997 = vst [vmem:[%s326 + $0x1d0] sm:$0xff] %v2917
        %2998 = vst [vmem:[%s326 + $0x1d8] sm:$0xff] %v2920
        %2999 = vst [vmem:[%s326 + $0x1e0] sm:$0xff] %v2925
        %3000 = vst [vmem:[%s326 + $0x1e8] sm:$0xff] %v2928
        %3001 = vst [vmem:[%s326 + $0x1f0] sm:$0xff] %v2933
        %3002 = vst [vmem:[%s326 + $0x1f8] sm:$0xff] %v2936
        %s3003 = sand.u32 %s225, 1
        %s3004 = scalar_lea.sflag [#allocation3], %s3003
        %s3005 = sand.u32 %s225, 1
        %s3006 = smul.addr %s3005, 512
        %s3007 = scalar_lea.vmem [#allocation2], %s3006
        // Predicated region
        $region57: #{tpu_custom_call.1} parent=55 // pred_check
          %p3008 = pneg %p235
        $region58: #{tpu_custom_call.1} parent=55 // pred_check_branch
          %3010 = sbr.rel (%p3008) target = $region60
        $region59: #{tpu_custom_call.1} parent=55 // pred_region
          %s3011 = smul.u32 64, %s23
          %s3013 = ssub.s32 8192, 8192
          %3014 = vsyncadd %s3004, %s3013
          %s3015 = smul.addr %s3011, 128
          %s3016 = scalar_lea.hbm %s9, %s3015
          %s3017 = sshll.u32 %s3007, 4
          %s3018 = int_to_ptr.vmem [resolvable:$true] %s3017
          %3023 = dma.vmem_to_hbm [thread:$0]  %s3018, 8192, %s3016, %s3004, 128, 128, 8
        $region60: #{tpu_custom_call.1} parent=55 // pred_fallthru
          _
      $region56: #{tpu_custom_call.1} parent=5 // pred_fallthru
        _
      %p3024 = scmp.le.s32.totalorder 2, %s18
      // Predicated region
      $region61: #{tpu_custom_call.1} parent=5 // pred_check
        %p3025 = pneg %p3024
      $region62: #{tpu_custom_call.1} parent=5 // pred_check_branch
        %3027 = sbr.rel (%p3025) target = $region64
      $region63: #{tpu_custom_call.1} parent=5 // pred_region
        %s3028 = ssub.s32 %s18, 2
        // Predicated region
        $region65: #{tpu_custom_call.1} parent=63 // pred_check
          %p3029 = pneg %p241
        $region66: #{tpu_custom_call.1} parent=63 // pred_check_branch
          %3031 = sbr.rel (%p3029) target = $region68
        $region67: #{tpu_custom_call.1} parent=63 // pred_region
          %s3032 = sand.u32 %s226, 1
          %s3033 = scalar_lea.sflag [#allocation3], %s3032
          %s3034 = sand.u32 %s226, 1
          %s3035 = smul.addr %s3034, 512
          %s3036 = scalar_lea.vmem [#allocation2], %s3035
          %3037 = dma.done %s3033, 8192
        $region68: #{tpu_custom_call.1} parent=63 // pred_fallthru
          _
      $region64: #{tpu_custom_call.1} parent=5 // pred_fallthru
        _
    $region6: #{tpu_custom_call.1} parent=1 // loop_footer
      %s22 = sadd.s32 1, %s18
    $region7: #{tpu_custom_call.1} parent=1 // loop_footer_branch
      %17 = sbr.rel target = $region3
    $region8: #{tpu_custom_call.1} parent=1 // loop_exit
      _
    %3038 = vsyncpa [#allocation3], 1
    %s3039 = scalar_lea.sflag [#allocation3], 1
    %3040 = vsyncpa %s3039, 1

</llo_original>
